<compile_context>
chip_gen: v6e
topology: v6e:2x2x1
jax: 0.10.0
libtpu: 0.0.40
codegen_flags: <defaults>
</compile_context>

<pallas_src>
import math

import jax
import jax.numpy as jnp
import numpy as np
from jax.experimental import pallas as pl
from jax.experimental.pallas import tpu as pltpu


# ----------------------------- configuration --------------------------------
BATCH = 2
SEQ_LEN = 8
NO_RIGID = 5                  # hard-coded "5" in the PyTorch module
N_RIGID = SEQ_LEN * NO_RIGID  # 40
ANGLE_DIM = 4                 # noised_angles last dim  -> sin/cos = 8
ESM_DIM = 12                  # seq_esm last dim
RT_DIM = 8                    # rigid_type last dim
RP_DIM = 6                    # rigid_property last dim (asserted == 6)
NF_DIM = RT_DIM + RP_DIM + ESM_DIM + 2 * ANGLE_DIM   # 34
C_N = 32                      # node channels (even, for timestep embedding)
C_Z = 32                      # pair channels (even)
RELPOS_K = 8
NO_BINS = 2 * RELPOS_K + 1    # 17
C_FUSED = 128                 # c_n + 2*c_z = 96, padded to a lane-dense 128


# ------------------------------- plain-JAX glue ------------------------------
def get_timestep_embedding(timesteps, embedding_dim, max_positions=10000):
    # matches the PyTorch reference exactly
    assert timesteps.ndim == 1
    assert embedding_dim % 2 == 0
    timesteps = timesteps * max_positions
    half_dim = embedding_dim // 2
    emb = math.log(max_positions) / (half_dim - 1)
    emb = jnp.exp(jnp.arange(half_dim, dtype=jnp.float32) * -emb)
    emb = timesteps.astype(jnp.float32)[:, None] * emb[None, :]
    return jnp.concatenate([jnp.sin(emb), jnp.cos(emb)], axis=1)


def relpos_embedding(seq_len, relpos_k, w_rp, b_rp):
    """relative_pos = one_hot(bin_idx) @ w_rp + b_rp  ==  w_rp[bin_idx] + b_rp (exact)."""
    idx = jnp.repeat(jnp.arange(seq_len, dtype=jnp.int32), NO_RIGID)        # (N,)
    d = idx[None, :] - idx[:, None]                                         # (N, N)
    bins = jnp.arange(-relpos_k, relpos_k + 1, dtype=jnp.int32)             # (nb,)
    bin_idx = jnp.argmin(jnp.abs(d[..., None] - bins[None, None, :]), axis=-1)
    return w_rp[bin_idx] + b_rp                                             # (N, N, c_z)


# ------------------------------- Pallas kernels ------------------------------
def _node_fused_kernel(nf_ref, w_ref, badd_ref, mask_ref, colsel_ref, out_ref):
    # One batch per grid step.  Single fused matmul for [tf_n | tf_z_i | tf_z_j] (+pad).
    x = nf_ref[0]                                                   # (N, nf_dim)
    y = jnp.dot(x, w_ref[...], preferred_element_type=jnp.float32)  # (N, 128)
    y = y + badd_ref[0]                     # biases + node_time / pair_time, pre-folded
    # rigid_mask only on the node lanes (colsel==1); identity on zi/zj/pad lanes.
    scale = 1.0 + colsel_ref[...] * (mask_ref[0] - 1.0)             # (N, 128)
    out_ref[0] = y * scale


def node_fused_pallas(node_feature, w_all, bias_add, rigid_mask, colsel):
    """node_feature: (B,N,D); w_all: (D,128); bias_add: (B,1,128); rigid_mask: (B,N,1);
    colsel: (1,128).  Returns fused (B,N,128) = [node_emb | zi+pair_time | zj | 0]."""
    B, N, D = node_feature.shape
    C = w_all.shape[1]
    return pl.pallas_call(
        _node_fused_kernel,
        out_shape=jax.ShapeDtypeStruct((B, N, C), jnp.float32),
        grid=(B,),
        in_specs=[pl.BlockSpec((1, N, D), lambda b: (b, 0, 0)),
                  pl.BlockSpec((D, C), lambda b: (0, 0)),
                  pl.BlockSpec((1, 1, C), lambda b: (b, 0, 0)),
                  pl.BlockSpec((1, N, 1), lambda b: (b, 0, 0)),
                  pl.BlockSpec((1, C), lambda b: (0, 0))],
        out_specs=pl.BlockSpec((1, N, C), lambda b: (b, 0, 0)),
        compiler_params=pltpu.CompilerParams(dimension_semantics=("parallel",)),
    )(node_feature, w_all, bias_add, rigid_mask, colsel)


def _pair_kernel(zi_ref, zj_ref, rp_ref, out_ref):
    # One batch per grid step; whole (N, N, c_z) block at once (pure VPU adds).
    zi = zi_ref[0]                                     # (N, c_z)  (pair_time pre-folded)
    zj = zj_ref[0]                                     # (N, c_z)
    out_ref[0] = zi[:, None, :] + zj[None, :, :] + rp_ref[...]


def pair_pallas(zi_t, zj, rp):
    """zi_t, zj: (B,N,c_z); rp: (N,N,c_z) -> (B,N,N,c_z)."""
    B, N, c_z = zi_t.shape
    return pl.pallas_call(
        _pair_kernel,
        out_shape=jax.ShapeDtypeStruct((B, N, N, c_z), jnp.float32),
        grid=(B,),
        in_specs=[pl.BlockSpec((1, N, c_z), lambda b: (b, 0, 0)),
                  pl.BlockSpec((1, N, c_z), lambda b: (b, 0, 0)),
                  pl.BlockSpec((N, N, c_z), lambda b: (0, 0, 0))],
        out_specs=pl.BlockSpec((1, N, N, c_z), lambda b: (b, 0, 0, 0)),
        compiler_params=pltpu.CompilerParams(dimension_semantics=("parallel",)),
    )(zi_t, zj, rp)


# ---------------------------- InputEmbedder forward ---------------------------
def input_embedder_forward(params, noised_angles, seq_esm, rigid_type, rigid_property,
                           rigid_mask, timesteps):
    B, L, _ = seq_esm.shape
    # glue: build node_feature exactly as in the PyTorch forward
    flat_rigid_type = rigid_type.reshape(B, -1, rigid_type.shape[-1])
    flat_rigid_property = rigid_property.reshape(B, -1, rigid_property.shape[-1])
    expand_seq = jnp.repeat(seq_esm, NO_RIGID, axis=1)
    sin_cos = jnp.concatenate([jnp.sin(noised_angles), jnp.cos(noised_angles)], axis=-1)
    expand_angle = jnp.repeat(sin_cos, NO_RIGID, axis=1)
    node_feature = jnp.concatenate(
        [flat_rigid_type, flat_rigid_property, expand_seq, expand_angle], axis=-1
    ).astype(jnp.float32)                                     # (B, N, NF_DIM)
    N = node_feature.shape[1]

    t = timesteps[:, 0]                                       # squeeze(-1)
    node_time = get_timestep_embedding(t, C_N)                # (B, c_n)
    pair_time = get_timestep_embedding(t, C_Z)                # (B, c_z)

    # fused weight [w_n | w_zi | w_zj | 0-pad] and per-batch additive vector
    w_all = jnp.concatenate([params["w_n"], params["w_zi"], params["w_zj"]], axis=1)
    pad = C_FUSED - w_all.shape[1]
    w_all = jnp.pad(w_all, ((0, 0), (0, pad)))                                # (D, 128)
    bias_add = jnp.concatenate(
        [params["b_n"] + node_time,                        # node lanes: bias + node_time
         params["b_zi"] + pair_time,                       # zi lanes: bias + pair_time (folded)
         jnp.broadcast_to(params["b_zj"], (B, C_Z)),       # zj lanes: bias
         jnp.zeros((B, pad), jnp.float32)], axis=-1)[:, None, :]              # (B, 1, 128)
    colsel = jnp.concatenate([jnp.ones((1, C_N), jnp.float32),
                              jnp.zeros((1, C_FUSED - C_N), jnp.float32)], axis=-1)

    fused = node_fused_pallas(
        node_feature, w_all, bias_add,
        rigid_mask.reshape(B, N, 1).astype(jnp.float32), colsel)              # (B, N, 128)

    node_emb = fused[..., :C_N]
    zi_t = fused[..., C_N:C_N + C_Z]          # already includes pair_time
    zj = fused[..., C_N + C_Z:C_N + 2 * C_Z]

    # relative_pos as an exact gather (replaces the per-row one-hot matmul)
    rp = relpos_embedding(L, RELPOS_K, params["w_rp"], params["b_rp"])        # (N, N, c_z)

    # nf_pair_emb + relative_pos + pair_time  (input to the undefined PairEmbedder)
    pair_emb_pre = pair_pallas(zi_t, zj, rp)
    return node_emb, pair_emb_pre


# ------------------------------------ main ------------------------------------
if __name__ == "__main__":
    key = jax.random.PRNGKey(0)
    ks = jax.random.split(key, 16)

    # "linear layer" parameters (weights stored (in, out), biases (1, out))
    params = {
        "w_n":  0.05 * jax.random.normal(ks[0], (NF_DIM, C_N), jnp.float32),
        "b_n":  0.05 * jax.random.normal(ks[1], (1, C_N), jnp.float32),
        "w_zi": 0.05 * jax.random.normal(ks[2], (NF_DIM, C_Z), jnp.float32),
        "b_zi": 0.05 * jax.random.normal(ks[3], (1, C_Z), jnp.float32),
        "w_zj": 0.05 * jax.random.normal(ks[4], (NF_DIM, C_Z), jnp.float32),
        "b_zj": 0.05 * jax.random.normal(ks[5], (1, C_Z), jnp.float32),
        "w_rp": 0.05 * jax.random.normal(ks[6], (NO_BINS, C_Z), jnp.float32),
        "b_rp": 0.05 * jax.random.normal(ks[7], (1, C_Z), jnp.float32),
    }

    noised_angles = jax.random.normal(ks[8], (BATCH, SEQ_LEN, ANGLE_DIM), jnp.float32)
    seq_esm = jax.random.normal(ks[9], (BATCH, SEQ_LEN, ESM_DIM), jnp.float32)
    rigid_type = jax.random.normal(ks[10], (BATCH, SEQ_LEN, NO_RIGID, RT_DIM), jnp.float32)
    rigid_property = jax.random.normal(ks[11], (BATCH, SEQ_LEN, NO_RIGID, RP_DIM), jnp.float32)
    rigid_mask = (jax.random.uniform(ks[12], (BATCH, N_RIGID)) > 0.2).astype(jnp.float32)
    timesteps = jax.random.uniform(ks[13], (BATCH, 1), jnp.float32)
    # distance / altered_direction / orientation / pair_mask are only consumed by the
    # undefined rbf()/quaternions()/PairEmbedder -> not used (see TODO at top of file).

    node_emb, pair_emb_pre = jax.jit(input_embedder_forward)(
        params, noised_angles, seq_esm, rigid_type, rigid_property, rigid_mask, timesteps)
    node_emb = jax.block_until_ready(node_emb)
    pair_emb_pre = jax.block_until_ready(pair_emb_pre)

    # ---- pure-JAX reference check ----
    B, L = BATCH, SEQ_LEN
    frt = rigid_type.reshape(B, -1, RT_DIM)
    frp = rigid_property.reshape(B, -1, RP_DIM)
    eseq = jnp.repeat(seq_esm, NO_RIGID, axis=1)
    sc = jnp.concatenate([jnp.sin(noised_angles), jnp.cos(noised_angles)], axis=-1)
    eang = jnp.repeat(sc, NO_RIGID, axis=1)
    nf = jnp.concatenate([frt, frp, eseq, eang], axis=-1)
    t = timesteps[:, 0]
    nt_ref = get_timestep_embedding(t, C_N)
    pt_ref = get_timestep_embedding(t, C_Z)
    node_ref = (nf @ params["w_n"] + params["b_n"] + nt_ref[:, None, :]) * rigid_mask[..., None]
    zi_ref = nf @ params["w_zi"] + params["b_zi"]
    zj_ref = nf @ params["w_zj"] + params["b_zj"]
    rp_ref = relpos_embedding(L, RELPOS_K, params["w_rp"], params["b_rp"])
    pair_ref = (zi_ref[:, :, None, :] + zj_ref[:, None, :, :]
                + rp_ref[None] + pt_ref[:, None, None, :])

    # Tolerance accounts for TPU default-precision (bf16 MXU) matmuls and sin/cos of
    # large timestep-embedding arguments; structural errors would be O(0.1-1).
    assert np.allclose(np.asarray(node_emb), np.asarray(node_ref), atol=2e-2, rtol=2e-2), \
        "node_emb mismatch"
    assert np.allclose(np.asarray(pair_emb_pre), np.asarray(pair_ref), atol=2e-2, rtol=2e-2), \
        "pair_emb mismatch"
    print("KERNEL_OK")
</pallas_src>

<mosaic_0001>
module attributes {stable_mosaic.version = 11 : i64} {
  func.func @_pair_kernel(%arg0: i32, %arg1: memref<1x40x32xf32, #tpu.memory_space<vmem>>, %arg2: memref<1x40x32xf32, #tpu.memory_space<vmem>>, %arg3: memref<40x40x32xf32, #tpu.memory_space<vmem>>, %arg4: memref<1x40x40x32xf32, #tpu.memory_space<vmem>>) attributes {dimension_semantics = [#tpu.dimension_semantics<parallel>], iteration_bounds = array<i64: 2>, scalar_prefetch = 0 : i64, scratch_operands = 0 : i64, tpu.core_type = #tpu.core_type<tc>, window_params = [{transform_indices = @transform_0, window_bounds = array<i64: 1, 40, 32>}, {transform_indices = @transform_1, window_bounds = array<i64: 1, 40, 32>}, {pipeline_mode = #tpu.pipeline_mode<synchronous>, transform_indices = @transform_2, window_bounds = array<i64: 40, 40, 32>}, {transform_indices = @transform_3, window_bounds = array<i64: 1, 40, 40, 32>}]} {
    %c0 = arith.constant 0 : index
    %c0_0 = arith.constant 0 : index
    %c0_1 = arith.constant 0 : index
    %0 = vector.load %arg1[%c0, %c0_0, %c0_1] : memref<1x40x32xf32, #tpu.memory_space<vmem>>, vector<1x40x32xf32>
    %1 = vector.shape_cast %0 : vector<1x40x32xf32> to vector<40x32xf32>
    %c0_2 = arith.constant 0 : index
    %c0_3 = arith.constant 0 : index
    %c0_4 = arith.constant 0 : index
    %2 = vector.load %arg2[%c0_2, %c0_3, %c0_4] : memref<1x40x32xf32, #tpu.memory_space<vmem>>, vector<1x40x32xf32>
    %3 = vector.shape_cast %2 : vector<1x40x32xf32> to vector<40x32xf32>
    %4 = vector.shape_cast %1 : vector<40x32xf32> to vector<40x1x32xf32>
    %5 = vector.shape_cast %3 : vector<40x32xf32> to vector<1x40x32xf32>
    %6 = vector.broadcast %4 : vector<40x1x32xf32> to vector<40x40x32xf32>
    %7 = vector.broadcast %5 : vector<1x40x32xf32> to vector<40x40x32xf32>
    %8 = arith.addf %6, %7 : vector<40x40x32xf32>
    %c0_5 = arith.constant 0 : index
    %c0_6 = arith.constant 0 : index
    %c0_7 = arith.constant 0 : index
    %9 = vector.load %arg3[%c0_5, %c0_6, %c0_7] : memref<40x40x32xf32, #tpu.memory_space<vmem>>, vector<40x40x32xf32>
    %10 = arith.addf %8, %9 : vector<40x40x32xf32>
    %c0_8 = arith.constant 0 : index
    %c0_9 = arith.constant 0 : index
    %c0_10 = arith.constant 0 : index
    %c0_11 = arith.constant 0 : index
    %11 = vector.load %arg4[%c0_8, %c0_9, %c0_10, %c0_11] : memref<1x40x40x32xf32, #tpu.memory_space<vmem>>, vector<1x40x40x32xf32>
    %12 = vector.shape_cast %11 : vector<1x40x40x32xf32> to vector<40x40x32xf32>
    %13 = vector.shape_cast %10 : vector<40x40x32xf32> to vector<1x40x40x32xf32>
    tpu.vector_store %arg4[%c0_8, %c0_9, %c0_10, %c0_11], %13 {strides = array<i32>} : memref<1x40x40x32xf32, #tpu.memory_space<vmem>>, vector<1x40x40x32xf32>,
    return
  }
  func.func @transform_0(%arg0: i32) -> (i32, i32, i32) {
    %c0_i32 = arith.constant 0 : i32
    %c0_i32_0 = arith.constant 0 : i32
    %c0_i32_1 = arith.constant 0 : i32
    return %arg0, %c0_i32, %c0_i32_0 : i32, i32, i32
  }
  func.func @transform_1(%arg0: i32) -> (i32, i32, i32) {
    %c0_i32 = arith.constant 0 : i32
    %c0_i32_0 = arith.constant 0 : i32
    %c0_i32_1 = arith.constant 0 : i32
    return %arg0, %c0_i32, %c0_i32_0 : i32, i32, i32
  }
  func.func @transform_2(%arg0: i32) -> (i32, i32, i32) {
    %c0_i32 = arith.constant 0 : i32
    %c0_i32_0 = arith.constant 0 : i32
    %c0_i32_1 = arith.constant 0 : i32
    %c0_i32_2 = arith.constant 0 : i32
    return %c0_i32, %c0_i32_0, %c0_i32_1 : i32, i32, i32
  }
  func.func @transform_3(%arg0: i32) -> (i32, i32, i32, i32) {
    %c0_i32 = arith.constant 0 : i32
    %c0_i32_0 = arith.constant 0 : i32
    %c0_i32_1 = arith.constant 0 : i32
    %c0_i32_2 = arith.constant 0 : i32
    return %arg0, %c0_i32, %c0_i32_0, %c0_i32_1 : i32, i32, i32, i32
  }
}

module attributes {stable_mosaic.version = 11 : i64} {
  func.func @_node_fused_kernel(%arg0: i32, %arg1: memref<1x40x34xf32, #tpu.memory_space<vmem>>, %arg2: memref<34x128xf32, #tpu.memory_space<vmem>>, %arg3: memref<1x1x128xf32, #tpu.memory_space<vmem>>, %arg4: memref<1x40x1xf32, #tpu.memory_space<vmem>>, %arg5: memref<1x128xf32, #tpu.memory_space<vmem>>, %arg6: memref<1x40x128xf32, #tpu.memory_space<vmem>>) attributes {dimension_semantics = [#tpu.dimension_semantics<parallel>], iteration_bounds = array<i64: 2>, scalar_prefetch = 0 : i64, scratch_operands = 0 : i64, tpu.core_type = #tpu.core_type<tc>, window_params = [{transform_indices = @transform_0, window_bounds = array<i64: 1, 40, 34>}, {pipeline_mode = #tpu.pipeline_mode<synchronous>, transform_indices = @transform_1, window_bounds = array<i64: 34, 128>}, {transform_indices = @transform_2, window_bounds = array<i64: 1, 1, 128>}, {transform_indices = @transform_3, window_bounds = array<i64: 1, 40, 1>}, {pipeline_mode = #tpu.pipeline_mode<synchronous>, transform_indices = @transform_4, window_bounds = array<i64: 1, 128>}, {transform_indices = @transform_5, window_bounds = array<i64: 1, 40, 128>}]} {
    %c0 = arith.constant 0 : index
    %c0_0 = arith.constant 0 : index
    %c0_1 = arith.constant 0 : index
    %0 = vector.load %arg1[%c0, %c0_0, %c0_1] : memref<1x40x34xf32, #tpu.memory_space<vmem>>, vector<1x40x34xf32>
    %1 = vector.shape_cast %0 : vector<1x40x34xf32> to vector<40x34xf32>
    %c0_2 = arith.constant 0 : index
    %c0_3 = arith.constant 0 : index
    %2 = vector.load %arg2[%c0_2, %c0_3] : memref<34x128xf32, #tpu.memory_space<vmem>>, vector<34x128xf32>
    %cst = arith.constant dense<0.000000e+00> : vector<40x128xf32>
    %3 = tpu.matmul %1, %2, %cst {dimension_numbers = #tpu.dot_dimension_numbers<[1], [0], [0], [1], [0, 0, 1, 1], [], []>} : vector<40x34xf32>, vector<34x128xf32>, vector<40x128xf32> -> vector<40x128xf32>
    %c0_4 = arith.constant 0 : index
    %c0_5 = arith.constant 0 : index
    %c0_6 = arith.constant 0 : index
    %4 = vector.load %arg3[%c0_4, %c0_5, %c0_6] : memref<1x1x128xf32, #tpu.memory_space<vmem>>, vector<1x1x128xf32>
    %5 = vector.shape_cast %4 : vector<1x1x128xf32> to vector<1x128xf32>
    %6 = vector.broadcast %5 : vector<1x128xf32> to vector<40x128xf32>
    %7 = arith.addf %3, %6 : vector<40x128xf32>
    %c0_7 = arith.constant 0 : index
    %c0_8 = arith.constant 0 : index
    %8 = vector.load %arg5[%c0_7, %c0_8] : memref<1x128xf32, #tpu.memory_space<vmem>>, vector<1x128xf32>
    %c0_9 = arith.constant 0 : index
    %c0_10 = arith.constant 0 : index
    %c0_11 = arith.constant 0 : index
    %9 = vector.load %arg4[%c0_9, %c0_10, %c0_11] : memref<1x40x1xf32, #tpu.memory_space<vmem>>, vector<1x40x1xf32>
    %10 = vector.shape_cast %9 : vector<1x40x1xf32> to vector<40x1xf32>
    %cst_12 = arith.constant 1.000000e+00 : f32
    %11 = vector.broadcast %cst_12 : f32 to vector<40x1xf32>
    %12 = arith.subf %10, %11 : vector<40x1xf32>
    %13 = vector.broadcast %8 : vector<1x128xf32> to vector<40x128xf32>
    %14 = vector.broadcast %12 : vector<40x1xf32> to vector<40x128xf32>
    %15 = arith.mulf %13, %14 : vector<40x128xf32>
    %cst_13 = arith.constant 1.000000e+00 : f32
    %16 = vector.broadcast %cst_13 : f32 to vector<40x128xf32>
    %17 = arith.addf %16, %15 : vector<40x128xf32>
    %18 = arith.mulf %7, %17 : vector<40x128xf32>
    %c0_14 = arith.constant 0 : index
    %c0_15 = arith.constant 0 : index
    %c0_16 = arith.constant 0 : index
    %19 = vector.load %arg6[%c0_14, %c0_15, %c0_16] : memref<1x40x128xf32, #tpu.memory_space<vmem>>, vector<1x40x128xf32>
    %20 = vector.shape_cast %19 : vector<1x40x128xf32> to vector<40x128xf32>
    %21 = vector.shape_cast %18 : vector<40x128xf32> to vector<1x40x128xf32>
    tpu.vector_store %arg6[%c0_14, %c0_15, %c0_16], %21 {strides = array<i32>} : memref<1x40x128xf32, #tpu.memory_space<vmem>>, vector<1x40x128xf32>,
    return
  }
  func.func @transform_0(%arg0: i32) -> (i32, i32, i32) {
    %c0_i32 = arith.constant 0 : i32
    %c0_i32_0 = arith.constant 0 : i32
    %c0_i32_1 = arith.constant 0 : i32
    return %arg0, %c0_i32, %c0_i32_0 : i32, i32, i32
  }
  func.func @transform_1(%arg0: i32) -> (i32, i32) {
    %c0_i32 = arith.constant 0 : i32
    %c0_i32_0 = arith.constant 0 : i32
    %c0_i32_1 = arith.constant 0 : i32
    return %c0_i32, %c0_i32_0 : i32, i32
  }
  func.func @transform_2(%arg0: i32) -> (i32, i32, i32) {
    %c0_i32 = arith.constant 0 : i32
    %c0_i32_0 = arith.constant 0 : i32
    %c0_i32_1 = arith.constant 0 : i32
    return %arg0, %c0_i32, %c0_i32_0 : i32, i32, i32
  }
  func.func @transform_3(%arg0: i32) -> (i32, i32, i32) {
    %c0_i32 = arith.constant 0 : i32
    %c0_i32_0 = arith.constant 0 : i32
    %c0_i32_1 = arith.constant 0 : i32
    return %arg0, %c0_i32, %c0_i32_0 : i32, i32, i32
  }
  func.func @transform_4(%arg0: i32) -> (i32, i32) {
    %c0_i32 = arith.constant 0 : i32
    %c0_i32_0 = arith.constant 0 : i32
    %c0_i32_1 = arith.constant 0 : i32
    return %c0_i32, %c0_i32_0 : i32, i32
  }
  func.func @transform_5(%arg0: i32) -> (i32, i32, i32) {
    %c0_i32 = arith.constant 0 : i32
    %c0_i32_0 = arith.constant 0 : i32
    %c0_i32_1 = arith.constant 0 : i32
    return %arg0, %c0_i32, %c0_i32_0 : i32, i32, i32
  }
}

</mosaic_0001>

<llo_original>
// kernel: input_embedder_forward.2
$region0: #{input_embedder_forward.2}
  #allocation0 [shape = 'u32[]', space=smem, size = 0x4, offset = 0x4, fixed_abs, tag = 'smem constant byte address 0x4 - core index']
  #allocation1 [shape = 'u32[144,128]{1,0:T(1,128)}', space=vmem, size = 0x12000, scoped, tag = 'internal scratch']
  %s0 = inlined_call_operand.vmem [shape: f32[2,40,34], index: 0, kind: input, shape index: {}]
  %s1 = inlined_call_operand.vmem [shape: f32[34,128], index: 1, kind: input, shape index: {}]
  %s2 = inlined_call_operand.vmem [shape: f32[2,1,128], index: 2, kind: input, shape index: {}]
  %s3 = inlined_call_operand.vmem [shape: f32[2,40,1], index: 3, kind: input, shape index: {}]
  %s4 = inlined_call_operand.hbm [shape: f32[1,128], index: 4, kind: input, shape index: {}]
  %s5 = inlined_call_operand.vmem [shape: f32[2,40,128], index: 5, kind: output, shape index: {}]
  %s6 = sld [smem:[#allocation0]]
  $region57: #{input_embedder_forward.2} parent=0
    _
  %s8 = ssub.s32 1, %s6
  %s9 = scalar_select 0, %s8, %s6
  $region1: #{input_embedder_forward.2} parent=0
    #allocation2 [shape = 'u8[512]{0}', space=vmem, size = 0x400, scoped, tag = 'input window, operand 4, single buffered']
    #allocation3 [shape = 's32[2]{0}', space=sflag, size = 0x8, scoped, tag = 'scoped memory for input_embedder_forward.2']
    %10 = vsyncpa [#allocation3], 0
    loop: start=0, step=1, limit=4
    $region2: #{input_embedder_forward.2} parent=1 // loop_pre_header
      _
    $region3: #{input_embedder_forward.2} parent=1 // loop_header
      %s12 = sphi 0, %s16
      %p13 = scmp.ge.s32.totalorder %s12, 4
      %s22 = sphi 0, %s24
      %s25 = sphi 0, %s22
      %s26 = sphi 0, %s25
      %s42 = sphi 0, %s26
      %s46 = sphi 0, %s46
      %s48 = sphi 0, %s46
      %s49 = sphi 0, %s48
      %s63 = sphi 0, %s49
      %s69 = sphi 0, %s71
      %s72 = sphi 0, %s69
      %s73 = sphi 0, %s72
      %s89 = sphi 0, %s73
      %s95 = sphi 0, %s97
      %s98 = sphi 0, %s95
      %s99 = sphi 0, %s98
      %s115 = sphi 0, %s99
      %s119 = sphi 0, %s119
      %s121 = sphi 0, %s119
      %s122 = sphi 0, %s121
      %s136 = sphi 0, %s122
      %s142 = sphi 0, %s144
      %s145 = sphi 0, %s142
      %s146 = sphi 0, %s145
      %s162 = sphi 0, %s146
    $region4: #{input_embedder_forward.2} parent=1 // loop_header_branch
      %15 = sbr.rel (%p13) target = $region8
    $region5: #{input_embedder_forward.2} parent=1 // loop_body
      %s17 = ssub.s32 %s12, 1
      %s18 = ssub.s32 %s12, 2
      %s19 = sadd.s32 %s12, 1
      %s20 = ssub.s32 %s12, %s19
      %p21 = scmp.eq.s32.totalorder %s20, 0
      %s23 = sadd.s32 %s22, 1
      %s24 = scalar_select %p21, %s22, %s23
      %p27 = pneg %p21
      %p28 = scmp.eq.s32.totalorder %s12, 1
      %p29 = por %p27, %p28
      %p30 = scmp.ne.s32.totalorder %s22, %s25
      %p31 = scmp.eq.s32.totalorder %s12, 0
      %p32 = por %p30, %p31
      %p33 = scmp.ne.s32.totalorder %s22, %s25
      %p34 = scmp.eq.s32.totalorder %s17, 1
      %p35 = por %p33, %p34
      %p36 = scmp.ne.s32.totalorder %s25, %s26
      %p37 = scmp.eq.s32.totalorder %s17, 0
      %p38 = por %p36, %p37
      %p39 = scmp.ne.s32.totalorder %s25, %s26
      %p40 = scmp.eq.s32.totalorder %s18, 1
      %p41 = por %p39, %p40
      %p43 = scmp.ne.s32.totalorder %s26, %s42
      %p44 = scmp.eq.s32.totalorder %s18, 0
      %p45 = por %p43, %p44
      %s47 = sadd.s32 %s46, 1
      %p50 = scmp.eq.s32.totalorder %s12, 1
      %p51 = scmp.ne.s32.totalorder %s46, %s48
      %p52 = scmp.eq.s32.totalorder %s12, 0
      %p53 = por %p51, %p52
      %p54 = scmp.ne.s32.totalorder %s46, %s48
      %p55 = scmp.eq.s32.totalorder %s17, 1
      %p56 = por %p54, %p55
      %p57 = scmp.ne.s32.totalorder %s48, %s49
      %p58 = scmp.eq.s32.totalorder %s17, 0
      %p59 = por %p57, %p58
      %p60 = scmp.ne.s32.totalorder %s48, %s49
      %p61 = scmp.eq.s32.totalorder %s18, 1
      %p62 = por %p60, %p61
      %p64 = scmp.ne.s32.totalorder %s49, %s63
      %p65 = scmp.eq.s32.totalorder %s18, 0
      %p66 = por %p64, %p65
      %s67 = ssub.s32 %s12, %s19
      %p68 = scmp.eq.s32.totalorder %s67, 0
      %s70 = sadd.s32 %s69, 1
      %s71 = scalar_select %p68, %s69, %s70
      %p74 = pneg %p68
      %p75 = scmp.eq.s32.totalorder %s12, 1
      %p76 = por %p74, %p75
      %p77 = scmp.ne.s32.totalorder %s69, %s72
      %p78 = scmp.eq.s32.totalorder %s12, 0
      %p79 = por %p77, %p78
      %p80 = scmp.ne.s32.totalorder %s69, %s72
      %p81 = scmp.eq.s32.totalorder %s17, 1
      %p82 = por %p80, %p81
      %p83 = scmp.ne.s32.totalorder %s72, %s73
      %p84 = scmp.eq.s32.totalorder %s17, 0
      %p85 = por %p83, %p84
      %p86 = scmp.ne.s32.totalorder %s72, %s73
      %p87 = scmp.eq.s32.totalorder %s18, 1
      %p88 = por %p86, %p87
      %p90 = scmp.ne.s32.totalorder %s73, %s89
      %p91 = scmp.eq.s32.totalorder %s18, 0
      %p92 = por %p90, %p91
      %s93 = ssub.s32 %s12, %s19
      %p94 = scmp.eq.s32.totalorder %s93, 0
      %s96 = sadd.s32 %s95, 1
      %s97 = scalar_select %p94, %s95, %s96
      %p100 = pneg %p94
      %p101 = scmp.eq.s32.totalorder %s12, 1
      %p102 = por %p100, %p101
      %p103 = scmp.ne.s32.totalorder %s95, %s98
      %p104 = scmp.eq.s32.totalorder %s12, 0
      %p105 = por %p103, %p104
      %p106 = scmp.ne.s32.totalorder %s95, %s98
      %p107 = scmp.eq.s32.totalorder %s17, 1
      %p108 = por %p106, %p107
      %p109 = scmp.ne.s32.totalorder %s98, %s99
      %p110 = scmp.eq.s32.totalorder %s17, 0
      %p111 = por %p109, %p110
      %p112 = scmp.ne.s32.totalorder %s98, %s99
      %p113 = scmp.eq.s32.totalorder %s18, 1
      %p114 = por %p112, %p113
      %p116 = scmp.ne.s32.totalorder %s99, %s115
      %p117 = scmp.eq.s32.totalorder %s18, 0
      %p118 = por %p116, %p117
      %s120 = sadd.s32 %s119, 1
      %p123 = scmp.eq.s32.totalorder %s12, 1
      %p124 = scmp.ne.s32.totalorder %s119, %s121
      %p125 = scmp.eq.s32.totalorder %s12, 0
      %p126 = por %p124, %p125
      %p127 = scmp.ne.s32.totalorder %s119, %s121
      %p128 = scmp.eq.s32.totalorder %s17, 1
      %p129 = por %p127, %p128
      %p130 = scmp.ne.s32.totalorder %s121, %s122
      %p131 = scmp.eq.s32.totalorder %s17, 0
      %p132 = por %p130, %p131
      %p133 = scmp.ne.s32.totalorder %s121, %s122
      %p134 = scmp.eq.s32.totalorder %s18, 1
      %p135 = por %p133, %p134
      %p137 = scmp.ne.s32.totalorder %s122, %s136
      %p138 = scmp.eq.s32.totalorder %s18, 0
      %p139 = por %p137, %p138
      %s140 = ssub.s32 %s12, %s19
      %p141 = scmp.eq.s32.totalorder %s140, 0
      %s143 = sadd.s32 %s142, 1
      %s144 = scalar_select %p141, %s142, %s143
      %p147 = pneg %p141
      %p148 = scmp.eq.s32.totalorder %s12, 1
      %p149 = por %p147, %p148
      %p150 = scmp.ne.s32.totalorder %s142, %s145
      %p151 = scmp.eq.s32.totalorder %s12, 0
      %p152 = por %p150, %p151
      %p153 = scmp.ne.s32.totalorder %s142, %s145
      %p154 = scmp.eq.s32.totalorder %s17, 1
      %p155 = por %p153, %p154
      %p156 = scmp.ne.s32.totalorder %s145, %s146
      %p157 = scmp.eq.s32.totalorder %s17, 0
      %p158 = por %p156, %p157
      %p159 = scmp.ne.s32.totalorder %s145, %s146
      %p160 = scmp.eq.s32.totalorder %s18, 1
      %p161 = por %p159, %p160
      %p163 = scmp.ne.s32.totalorder %s146, %s162
      %p164 = scmp.eq.s32.totalorder %s18, 0
      %p165 = por %p163, %p164
      %p166 = scmp.le.s32.totalorder 1, %s12
      %p167 = scmp.lt.s32.totalorder %s12, 3
      %p168 = pnand %p166, %p167
      %p169 = pneg %p168
      // Predicated region
      $region9: #{input_embedder_forward.2} parent=5 // pred_check
        _
      $region10: #{input_embedder_forward.2} parent=5 // pred_check_branch
        %171 = sbr.rel (%p168) target = $region12
      $region11: #{input_embedder_forward.2} parent=5 // pred_region
        %s172 = ssub.s32 %s12, 1
        // Predicated region
        $region13: #{input_embedder_forward.2} parent=11 // pred_check
          %p173 = pneg %p59
        $region14: #{input_embedder_forward.2} parent=11 // pred_check_branch
          %175 = sbr.rel (%p173) target = $region16
        $region15: #{input_embedder_forward.2} parent=11 // pred_region
          _
        $region16: #{input_embedder_forward.2} parent=11 // pred_fallthru
          _
        // Predicated region
        $region17: #{input_embedder_forward.2} parent=11 // pred_check
          %p176 = pneg %p132
        $region18: #{input_embedder_forward.2} parent=11 // pred_check_branch
          %178 = sbr.rel (%p176) target = $region20
        $region19: #{input_embedder_forward.2} parent=11 // pred_region
          %s180 = ssub.s32 16, 16
          %181 = vsyncadd [#allocation3], %s180
          %s183 = sshll.u32 [#allocation2], 4
          %s184 = int_to_ptr.vmem [resolvable:$true] %s183
          %186 = dma.hbm_to_vmem [thread:$0]  %s4, 16, %s184, [#allocation3]
        $region20: #{input_embedder_forward.2} parent=11 // pred_fallthru
          _
      $region12: #{input_embedder_forward.2} parent=5 // pred_fallthru
        _
      %p187 = scmp.lt.s32.totalorder %s12, 2
      // Predicated region
      $region21: #{input_embedder_forward.2} parent=5 // pred_check
        %p188 = pneg %p187
      $region22: #{input_embedder_forward.2} parent=5 // pred_check_branch
        %190 = sbr.rel (%p188) target = $region24
      $region23: #{input_embedder_forward.2} parent=5 // pred_region
        // Predicated region
        $region25: #{input_embedder_forward.2} parent=23 // pred_check
          %p191 = pneg %p32
        $region26: #{input_embedder_forward.2} parent=23 // pred_check_branch
          %193 = sbr.rel (%p191) target = $region28
        $region27: #{input_embedder_forward.2} parent=23 // pred_region
          %p194 = scmp.lt.s32.totalorder %s12, 1
          %s195 = scalar_select %p194, %s12, 1
          %s196 = smul.addr %s195, 5
          %s197 = smul.addr %s196, 8
          %s198 = scalar_lea.vmem %s0, %s197
        $region28: #{input_embedder_forward.2} parent=23 // pred_fallthru
          _
        // Predicated region
        $region29: #{input_embedder_forward.2} parent=23 // pred_check
          %p199 = pneg %p79
        $region30: #{input_embedder_forward.2} parent=23 // pred_check_branch
          %201 = sbr.rel (%p199) target = $region32
        $region31: #{input_embedder_forward.2} parent=23 // pred_region
          %p202 = scmp.lt.s32.totalorder %s12, 1
          %s203 = scalar_select %p202, %s12, 1
          %s204 = scalar_lea.vmem %s2, %s203
        $region32: #{input_embedder_forward.2} parent=23 // pred_fallthru
          _
        // Predicated region
        $region33: #{input_embedder_forward.2} parent=23 // pred_check
          %p205 = pneg %p105
        $region34: #{input_embedder_forward.2} parent=23 // pred_check_branch
          %207 = sbr.rel (%p205) target = $region36
        $region35: #{input_embedder_forward.2} parent=23 // pred_region
          %p208 = scmp.lt.s32.totalorder %s12, 1
          %s209 = scalar_select %p208, %s12, 1
          %s210 = smul.addr %s209, 5
          %s211 = smul.addr %s210, 8
          %s212 = scalar_lea.vmem %s3, %s211
        $region36: #{input_embedder_forward.2} parent=23 // pred_fallthru
          _
      $region24: #{input_embedder_forward.2} parent=5 // pred_fallthru
        _
      %p213 = scmp.le.s32.totalorder 1, %s12
      %p214 = scmp.lt.s32.totalorder %s12, 3
      %p215 = pnand %p213, %p214
      %p216 = pneg %p215
      // Predicated region
      $region37: #{input_embedder_forward.2} parent=5 // pred_check
        _
      $region38: #{input_embedder_forward.2} parent=5 // pred_check_branch
        %218 = sbr.rel (%p215) target = $region40
      $region39: #{input_embedder_forward.2} parent=5 // pred_region
        %s219 = ssub.s32 %s12, 1
        // Predicated region
        $region41: #{input_embedder_forward.2} parent=39 // pred_check
          %p220 = pneg %p132
        $region42: #{input_embedder_forward.2} parent=39 // pred_check_branch
          %222 = sbr.rel (%p220) target = $region44
        $region43: #{input_embedder_forward.2} parent=39 // pred_region
          %223 = dma.done [#allocation3], 16
        $region44: #{input_embedder_forward.2} parent=39 // pred_fallthru
          _
        %p224 = scmp.lt.s32.totalorder %s17, 1
        %s225 = scalar_select %p224, %s17, 1
        %s226 = smul.addr %s225, 5
        %s227 = smul.addr %s226, 8
        %s228 = scalar_lea.vmem %s0, %s227
        %p229 = pneg %p38
        %p230 = pneg %p35
        %p231 = pneg %p59
        %p232 = pneg %p56
        %p233 = scmp.lt.s32.totalorder %s17, 1
        %s234 = scalar_select %p233, %s17, 1
        %s235 = scalar_lea.vmem %s2, %s234
        %p236 = pneg %p85
        %p237 = pneg %p82
        %p238 = scmp.lt.s32.totalorder %s17, 1
        %s239 = scalar_select %p238, %s17, 1
        %s240 = smul.addr %s239, 5
        %s241 = smul.addr %s240, 8
        %s242 = scalar_lea.vmem %s3, %s241
        %p243 = pneg %p111
        %p244 = pneg %p108
        %p245 = pneg %p132
        %p246 = pneg %p129
        %p247 = pneg %p158
        %p248 = pneg %p155
        %p249 = scmp.lt.s32.totalorder %s17, 1
        %s250 = scalar_select %p249, %s17, 1
        %s251 = smul.addr %s250, 5
        %s252 = smul.addr %s251, 8
        %s253 = scalar_lea.vmem %s5, %s252
        %p254 = scmp.lt.s32.totalorder %s17, 1
        %s255 = scalar_select %p254, %s17, 1
        %s256 = smul.addr %s255, 5
        %s257 = smul.addr %s256, 8
        %s258 = scalar_lea.vmem %s0, %s257
        %p259 = scmp.lt.s32.totalorder %s17, 1
        %s260 = scalar_select %p259, %s17, 1
        %s261 = scalar_lea.vmem %s2, %s260
        %p262 = scmp.lt.s32.totalorder %s17, 1
        %s263 = scalar_select %p262, %s17, 1
        %s264 = smul.addr %s263, 5
        %s265 = smul.addr %s264, 8
        %s266 = scalar_lea.vmem %s3, %s265
        %p267 = scmp.lt.s32.totalorder %s17, 1
        %s268 = scalar_select %p267, %s17, 1
        %s269 = smul.addr %s268, 5
        %s270 = smul.addr %s269, 8
        %s271 = scalar_lea.vmem %s5, %s270
        %v272 = vld [vmem:[%s258] sm:$0xff]
        %v273 = vld [vmem:[%s258 + $0x8] sm:$0xff]
        %v274 = vld [vmem:[%s258 + $0x10] sm:$0xff]
        %v275 = vld [vmem:[%s258 + $0x18] sm:$0xff]
        %v276 = vld [vmem:[%s258 + $0x20] sm:$0xff]
        %v277 = vld [vmem:[%s1] sm:$0xff]
        %v278 = vld [vmem:[%s1 + $0x8] sm:$0xff]
        %v279 = vld [vmem:[%s1 + $0x10] sm:$0xff]
        %v280 = vld [vmem:[%s1 + $0x18] sm:$0xff]
        %v281 = vld [vmem:[%s1 + $0x20] sm:$0x3]
        %v282 = vld [vmem:[%s261] sm:$0x1]
        %v284 = vlaneseq
        %v285 = vshrl.u32 %v284, 7
        %v286 = vsub.s32 0, %v285
        %v287 = vrot.slane %v282, %v286
        %vm289 = vcmask 277504
        %v291 = vsel %vm289, %v272, 0
        %v294 = vsel %vm289, %v273, 0
        %v297 = vsel %vm289, %v274, 0
        %v300 = vsel %vm289, %v275, 0
        %v303 = vsel %vm289, %v276, 0
        %vm305 = vcmask 1041408
        %v307 = vsel %vm305, %v281, 0
        %309 = vmatprep.subr.mxu0 0.0
        %310 = vmatpush1.msra.mxu0 0.0
        %311 = vmatprep.subr.mxu0 0.0
        %312 = vmatpush1.msra.mxu0 0.0
        %313 = vmatprep.subr.mxu0 0.0
        %314 = vmatpush1.msra.mxu0 0.0
        %315 = vmatprep.subr.mxu0 0.0
        %316 = vmatpush1.msra.mxu0 0.0
        %317 = vmatprep.subr.mxu0 0.0
        %318 = vmatpush1.msra.mxu0 0.0
        %319 = vmatprep.subr.mxu0 0.0
        %320 = vmatpush1.msra.mxu0 0.0
        %321 = vmatprep.subr.mxu0 0.0
        %322 = vmatpush1.msra.mxu0 0.0
        %323 = vmatprep.subr.mxu0 0.0
        %324 = vmatpush1.msra.mxu0 0.0
        %325 = vmatprep.subr.mxu0 0.0
        %326 = vmatpush1.msra.mxu0 0.0
        %327 = vmatprep.subr.mxu0 0.0
        %328 = vmatpush1.msra.mxu0 0.0
        %329 = vmatprep.subr.mxu0 0.0
        %330 = vmatpush1.msra.mxu0 0.0
        %331 = vmatprep.subr.mxu0 0.0
        %332 = vmatpush1.msra.mxu0 %v307
        %333 = vmatprep.subr.mxu0 0.0
        %334 = vmatpush1.msra.mxu0 %v280
        %335 = vmatprep.subr.mxu0 0.0
        %336 = vmatpush1.msra.mxu0 %v279
        %337 = vmatprep.subr.mxu0 0.0
        %338 = vmatpush1.msra.mxu0 %v278
        %339 = vmatprep.subr.mxu0 0.0
        %340 = vmatpush1.msra.mxu0 %v277
        %341 = vmatprep.subr.mxu0 0.0
        %342 = vmatpush2.msra.mxu0 0.0
        %343 = vmatprep.subr.mxu0 0.0
        %344 = vmatpush2.msra.mxu0 0.0
        %345 = vmatprep.subr.mxu0 0.0
        %346 = vmatpush2.msra.mxu0 0.0
        %347 = vmatprep.subr.mxu0 0.0
        %348 = vmatpush2.msra.mxu0 0.0
        %349 = vmatprep.subr.mxu0 0.0
        %350 = vmatpush2.msra.mxu0 0.0
        %351 = vmatprep.subr.mxu0 0.0
        %352 = vmatpush2.msra.mxu0 0.0
        %353 = vmatprep.subr.mxu0 0.0
        %354 = vmatpush2.msra.mxu0 0.0
        %355 = vmatprep.subr.mxu0 0.0
        %356 = vmatpush2.msra.mxu0 0.0
        %357 = vmatprep.subr.mxu0 0.0
        %358 = vmatpush2.msra.mxu0 0.0
        %359 = vmatprep.subr.mxu0 0.0
        %360 = vmatpush2.msra.mxu0 0.0
        %361 = vmatprep.subr.mxu0 0.0
        %362 = vmatpush2.msra.mxu0 0.0
        %363 = vmatprep.subr.mxu0 0.0
        %364 = vmatpush2.msra.mxu0 0.0
        %365 = vmatprep.subr.mxu0 0.0
        %366 = vmatpush2.msra.mxu0 0.0
        %367 = vmatprep.subr.mxu0 0.0
        %368 = vmatpush2.msra.mxu0 0.0
        %369 = vmatprep.subr.mxu0 0.0
        %370 = vmatpush2.msra.mxu0 0.0
        %371 = vmatprep.subr.mxu0 0.0
        %372 = vmatpush2.msra.mxu0 0.0
        %373 = vmatprep.mubr.f32.mxu0 0.0
        %374 = vmatmul.mubr.f32.gmra.mxu0 %v291
        %v375 = vpop.f32.mrf.mxu0
        %v376 = vadd.f32 %v287, %v375
        %v377 = vpop.f32.mrf.mxu0
        %378 = vmatprep.mubr.f32.mxu0 0.0
        %379 = vmatmul.mubr.f32.gmra.mxu0 %v294
        %v380 = vpop.f32.mrf.mxu0
        %v381 = vadd.f32 %v287, %v380
        %v382 = vpop.f32.mrf.mxu0
        %383 = vmatprep.mubr.f32.mxu0 0.0
        %384 = vmatmul.mubr.f32.gmra.mxu0 %v297
        %v385 = vpop.f32.mrf.mxu0
        %v386 = vadd.f32 %v287, %v385
        %v387 = vpop.f32.mrf.mxu0
        %388 = vmatprep.mubr.f32.mxu0 0.0
        %389 = vmatmul.mubr.f32.gmra.mxu0 %v300
        %v390 = vpop.f32.mrf.mxu0
        %v391 = vadd.f32 %v287, %v390
        %v392 = vpop.f32.mrf.mxu0
        %393 = vmatprep.mubr.f32.mxu0 0.0
        %394 = vmatmul.mubr.f32.gmra.mxu0 %v303
        %v395 = vpop.f32.mrf.mxu0
        %v396 = vadd.f32 %v287, %v395
        %v397 = vpop.f32.mrf.mxu0
        %398 = vdwg.mxu0
        %v399 = vld [vmem:[#allocation2] sm:$0x1]
        %v400 = vld [vmem:[%s266] sm:$0xff]
        %v401 = vld [vmem:[%s266 + $0x8] sm:$0xff]
        %v402 = vld [vmem:[%s266 + $0x10] sm:$0xff]
        %v403 = vld [vmem:[%s266 + $0x18] sm:$0xff]
        %v404 = vld [vmem:[%s266 + $0x20] sm:$0xff]
        %v405 = vsub.f32 %v400, 1.0
        %v406 = vsub.f32 %v401, 1.0
        %v407 = vsub.f32 %v402, 1.0
        %v408 = vsub.f32 %v403, 1.0
        %v409 = vsub.f32 %v404, 1.0
        %v411 = vlaneseq
        %v412 = vshrl.u32 %v411, 7
        %v413 = vsub.s32 0, %v412
        %v414 = vrot.slane %v399, %v413
        %417 = vset.pattern.permute.xlu0 0
        %418 = vperm.xlu0 %417, %v405
        %v419 = vpop.permute.xlu0 %418
        %422 = vset.pattern.permute.xlu0 0
        %423 = vperm.xlu0 %422, %v406
        %v424 = vpop.permute.xlu0 %423
        %427 = vset.pattern.permute.xlu0 0
        %428 = vperm.xlu0 %427, %v407
        %v429 = vpop.permute.xlu0 %428
        %432 = vset.pattern.permute.xlu0 0
        %433 = vperm.xlu0 %432, %v408
        %v434 = vpop.permute.xlu0 %433
        %437 = vset.pattern.permute.xlu0 0
        %438 = vperm.xlu0 %437, %v409
        %v439 = vpop.permute.xlu0 %438
        %v441 = vmul.f32 %v414, %v419
        %v442 = vmul.f32 %v414, %v424
        %v443 = vmul.f32 %v414, %v429
        %v444 = vmul.f32 %v414, %v434
        %v445 = vmul.f32 %v414, %v439
        %v446 = vadd.f32 %v441, 1.0
        %v447 = vadd.f32 %v442, 1.0
        %v448 = vadd.f32 %v443, 1.0
        %v449 = vadd.f32 %v444, 1.0
        %v450 = vadd.f32 %v445, 1.0
        %v451 = vmul.f32 %v376, %v446
        %v452 = vmul.f32 %v381, %v447
        %v453 = vmul.f32 %v386, %v448
        %v454 = vmul.f32 %v391, %v449
        %v455 = vmul.f32 %v396, %v450
        %456 = vst [vmem:[%s271] sm:$0xff] %v451
        %457 = vst [vmem:[%s271 + $0x8] sm:$0xff] %v452
        %458 = vst [vmem:[%s271 + $0x10] sm:$0xff] %v453
        %459 = vst [vmem:[%s271 + $0x18] sm:$0xff] %v454
        %460 = vst [vmem:[%s271 + $0x20] sm:$0xff] %v455
        %p461 = scmp.lt.s32.totalorder %s17, 1
        %s462 = scalar_select %p461, %s17, 1
        %s463 = smul.addr %s462, 5
        %s464 = smul.addr %s463, 8
        %s465 = scalar_lea.vmem %s5, %s464
        // Predicated region
        $region45: #{input_embedder_forward.2} parent=39 // pred_check
          %p466 = pneg %p155
        $region46: #{input_embedder_forward.2} parent=39 // pred_check_branch
          %468 = sbr.rel (%p466) target = $region48
        $region47: #{input_embedder_forward.2} parent=39 // pred_region
          _
        $region48: #{input_embedder_forward.2} parent=39 // pred_fallthru
          _
      $region40: #{input_embedder_forward.2} parent=5 // pred_fallthru
        _
      %p469 = scmp.le.s32.totalorder 2, %s12
      // Predicated region
      $region49: #{input_embedder_forward.2} parent=5 // pred_check
        %p470 = pneg %p469
      $region50: #{input_embedder_forward.2} parent=5 // pred_check_branch
        %472 = sbr.rel (%p470) target = $region52
      $region51: #{input_embedder_forward.2} parent=5 // pred_region
        %s473 = ssub.s32 %s12, 2
        // Predicated region
        $region53: #{input_embedder_forward.2} parent=51 // pred_check
          %p474 = pneg %p161
        $region54: #{input_embedder_forward.2} parent=51 // pred_check_branch
          %476 = sbr.rel (%p474) target = $region56
        $region55: #{input_embedder_forward.2} parent=51 // pred_region
          %p477 = scmp.lt.s32.totalorder %s18, 1
          %s478 = scalar_select %p477, %s18, 1
          %s479 = smul.addr %s478, 5
          %s480 = smul.addr %s479, 8
          %s481 = scalar_lea.vmem %s5, %s480
        $region56: #{input_embedder_forward.2} parent=51 // pred_fallthru
          _
      $region52: #{input_embedder_forward.2} parent=5 // pred_fallthru
        _
    $region6: #{input_embedder_forward.2} parent=1 // loop_footer
      %s16 = sadd.s32 1, %s12
    $region7: #{input_embedder_forward.2} parent=1 // loop_footer_branch
      %11 = sbr.rel target = $region3
    $region8: #{input_embedder_forward.2} parent=1 // loop_exit
      _
    %482 = vsyncpa [#allocation3], 1
    %s483 = scalar_lea.sflag [#allocation3], 1
    %484 = vsyncpa %s483, 1

// kernel: input_embedder_forward.3
$region0: #{input_embedder_forward.3}
  #allocation0 [shape = 'u32[]', space=smem, size = 0x4, offset = 0x4, fixed_abs, tag = 'smem constant byte address 0x4 - core index']
  #allocation1 [shape = 'u32[144,128]{1,0:T(1,128)}', space=vmem, size = 0x12000, scoped, tag = 'internal scratch']
  %s0 = inlined_call_operand.vmem [shape: f32[2,40,32], index: 0, kind: input, shape index: {}]
  %s1 = inlined_call_operand.vmem [shape: f32[2,40,32], index: 1, kind: input, shape index: {}]
  %s2 = inlined_call_operand.vmem [shape: f32[40,40,32], index: 2, kind: input, shape index: {}]
  %s3 = inlined_call_operand.vmem [shape: f32[2,40,40,32], index: 3, kind: output, shape index: {}]
  %s4 = sld [smem:[#allocation0]]
  $region45: #{input_embedder_forward.3} parent=0
    _
  %s6 = ssub.s32 1, %s4
  %s7 = scalar_select 0, %s6, %s4
  loop: start=0, step=1, limit=4
  $region2: #{input_embedder_forward.3} parent=0 // loop_pre_header
    _
  $region3: #{input_embedder_forward.3} parent=0 // loop_header
    %s9 = sphi 0, %s13
    %p10 = scmp.ge.s32.totalorder %s9, 4
    %s19 = sphi 0, %s21
    %s22 = sphi 0, %s19
    %s23 = sphi 0, %s22
    %s39 = sphi 0, %s23
    %s45 = sphi 0, %s47
    %s48 = sphi 0, %s45
    %s49 = sphi 0, %s48
    %s65 = sphi 0, %s49
    %s69 = sphi 0, %s69
    %s71 = sphi 0, %s69
    %s72 = sphi 0, %s71
    %s86 = sphi 0, %s72
    %s92 = sphi 0, %s94
    %s95 = sphi 0, %s92
    %s96 = sphi 0, %s95
    %s112 = sphi 0, %s96
  $region4: #{input_embedder_forward.3} parent=0 // loop_header_branch
    %12 = sbr.rel (%p10) target = $region8
  $region5: #{input_embedder_forward.3} parent=0 // loop_body
    %s14 = ssub.s32 %s9, 1
    %s15 = ssub.s32 %s9, 2
    %s16 = sadd.s32 %s9, 1
    %s17 = ssub.s32 %s9, %s16
    %p18 = scmp.eq.s32.totalorder %s17, 0
    %s20 = sadd.s32 %s19, 1
    %s21 = scalar_select %p18, %s19, %s20
    %p24 = pneg %p18
    %p25 = scmp.eq.s32.totalorder %s9, 1
    %p26 = por %p24, %p25
    %p27 = scmp.ne.s32.totalorder %s19, %s22
    %p28 = scmp.eq.s32.totalorder %s9, 0
    %p29 = por %p27, %p28
    %p30 = scmp.ne.s32.totalorder %s19, %s22
    %p31 = scmp.eq.s32.totalorder %s14, 1
    %p32 = por %p30, %p31
    %p33 = scmp.ne.s32.totalorder %s22, %s23
    %p34 = scmp.eq.s32.totalorder %s14, 0
    %p35 = por %p33, %p34
    %p36 = scmp.ne.s32.totalorder %s22, %s23
    %p37 = scmp.eq.s32.totalorder %s15, 1
    %p38 = por %p36, %p37
    %p40 = scmp.ne.s32.totalorder %s23, %s39
    %p41 = scmp.eq.s32.totalorder %s15, 0
    %p42 = por %p40, %p41
    %s43 = ssub.s32 %s9, %s16
    %p44 = scmp.eq.s32.totalorder %s43, 0
    %s46 = sadd.s32 %s45, 1
    %s47 = scalar_select %p44, %s45, %s46
    %p50 = pneg %p44
    %p51 = scmp.eq.s32.totalorder %s9, 1
    %p52 = por %p50, %p51
    %p53 = scmp.ne.s32.totalorder %s45, %s48
    %p54 = scmp.eq.s32.totalorder %s9, 0
    %p55 = por %p53, %p54
    %p56 = scmp.ne.s32.totalorder %s45, %s48
    %p57 = scmp.eq.s32.totalorder %s14, 1
    %p58 = por %p56, %p57
    %p59 = scmp.ne.s32.totalorder %s48, %s49
    %p60 = scmp.eq.s32.totalorder %s14, 0
    %p61 = por %p59, %p60
    %p62 = scmp.ne.s32.totalorder %s48, %s49
    %p63 = scmp.eq.s32.totalorder %s15, 1
    %p64 = por %p62, %p63
    %p66 = scmp.ne.s32.totalorder %s49, %s65
    %p67 = scmp.eq.s32.totalorder %s15, 0
    %p68 = por %p66, %p67
    %s70 = sadd.s32 %s69, 1
    %p73 = scmp.eq.s32.totalorder %s9, 1
    %p74 = scmp.ne.s32.totalorder %s69, %s71
    %p75 = scmp.eq.s32.totalorder %s9, 0
    %p76 = por %p74, %p75
    %p77 = scmp.ne.s32.totalorder %s69, %s71
    %p78 = scmp.eq.s32.totalorder %s14, 1
    %p79 = por %p77, %p78
    %p80 = scmp.ne.s32.totalorder %s71, %s72
    %p81 = scmp.eq.s32.totalorder %s14, 0
    %p82 = por %p80, %p81
    %p83 = scmp.ne.s32.totalorder %s71, %s72
    %p84 = scmp.eq.s32.totalorder %s15, 1
    %p85 = por %p83, %p84
    %p87 = scmp.ne.s32.totalorder %s72, %s86
    %p88 = scmp.eq.s32.totalorder %s15, 0
    %p89 = por %p87, %p88
    %s90 = ssub.s32 %s9, %s16
    %p91 = scmp.eq.s32.totalorder %s90, 0
    %s93 = sadd.s32 %s92, 1
    %s94 = scalar_select %p91, %s92, %s93
    %p97 = pneg %p91
    %p98 = scmp.eq.s32.totalorder %s9, 1
    %p99 = por %p97, %p98
    %p100 = scmp.ne.s32.totalorder %s92, %s95
    %p101 = scmp.eq.s32.totalorder %s9, 0
    %p102 = por %p100, %p101
    %p103 = scmp.ne.s32.totalorder %s92, %s95
    %p104 = scmp.eq.s32.totalorder %s14, 1
    %p105 = por %p103, %p104
    %p106 = scmp.ne.s32.totalorder %s95, %s96
    %p107 = scmp.eq.s32.totalorder %s14, 0
    %p108 = por %p106, %p107
    %p109 = scmp.ne.s32.totalorder %s95, %s96
    %p110 = scmp.eq.s32.totalorder %s15, 1
    %p111 = por %p109, %p110
    %p113 = scmp.ne.s32.totalorder %s96, %s112
    %p114 = scmp.eq.s32.totalorder %s15, 0
    %p115 = por %p113, %p114
    %p116 = scmp.le.s32.totalorder 1, %s9
    %p117 = scmp.lt.s32.totalorder %s9, 3
    %p118 = pnand %p116, %p117
    %p119 = pneg %p118
    // Predicated region
    $region9: #{input_embedder_forward.3} parent=5 // pred_check
      _
    $region10: #{input_embedder_forward.3} parent=5 // pred_check_branch
      %121 = sbr.rel (%p118) target = $region12
    $region11: #{input_embedder_forward.3} parent=5 // pred_region
      %s122 = ssub.s32 %s9, 1
      // Predicated region
      $region13: #{input_embedder_forward.3} parent=11 // pred_check
        %p123 = pneg %p82
      $region14: #{input_embedder_forward.3} parent=11 // pred_check_branch
        %125 = sbr.rel (%p123) target = $region16
      $region15: #{input_embedder_forward.3} parent=11 // pred_region
        _
      $region16: #{input_embedder_forward.3} parent=11 // pred_fallthru
        _
    $region12: #{input_embedder_forward.3} parent=5 // pred_fallthru
      _
    %p126 = scmp.lt.s32.totalorder %s9, 2
    // Predicated region
    $region17: #{input_embedder_forward.3} parent=5 // pred_check
      %p127 = pneg %p126
    $region18: #{input_embedder_forward.3} parent=5 // pred_check_branch
      %129 = sbr.rel (%p127) target = $region20
    $region19: #{input_embedder_forward.3} parent=5 // pred_region
      // Predicated region
      $region21: #{input_embedder_forward.3} parent=19 // pred_check
        %p130 = pneg %p29
      $region22: #{input_embedder_forward.3} parent=19 // pred_check_branch
        %132 = sbr.rel (%p130) target = $region24
      $region23: #{input_embedder_forward.3} parent=19 // pred_region
        %p133 = scmp.lt.s32.totalorder %s9, 1
        %s134 = scalar_select %p133, %s9, 1
        %s135 = smul.addr %s134, 5
        %s136 = smul.addr %s135, 8
        %s137 = scalar_lea.vmem %s0, %s136
      $region24: #{input_embedder_forward.3} parent=19 // pred_fallthru
        _
      // Predicated region
      $region25: #{input_embedder_forward.3} parent=19 // pred_check
        %p138 = pneg %p55
      $region26: #{input_embedder_forward.3} parent=19 // pred_check_branch
        %140 = sbr.rel (%p138) target = $region28
      $region27: #{input_embedder_forward.3} parent=19 // pred_region
        %p141 = scmp.lt.s32.totalorder %s9, 1
        %s142 = scalar_select %p141, %s9, 1
        %s143 = smul.addr %s142, 5
        %s144 = smul.addr %s143, 8
        %s145 = scalar_lea.vmem %s1, %s144
      $region28: #{input_embedder_forward.3} parent=19 // pred_fallthru
        _
    $region20: #{input_embedder_forward.3} parent=5 // pred_fallthru
      _
    %p146 = scmp.le.s32.totalorder 1, %s9
    %p147 = scmp.lt.s32.totalorder %s9, 3
    %p148 = pnand %p146, %p147
    %p149 = pneg %p148
    // Predicated region
    $region29: #{input_embedder_forward.3} parent=5 // pred_check
      _
    $region30: #{input_embedder_forward.3} parent=5 // pred_check_branch
      %151 = sbr.rel (%p148) target = $region32
    $region31: #{input_embedder_forward.3} parent=5 // pred_region
      %s152 = ssub.s32 %s9, 1
      %p153 = scmp.lt.s32.totalorder %s14, 1
      %s154 = scalar_select %p153, %s14, 1
      %s155 = smul.addr %s154, 5
      %s156 = smul.addr %s155, 8
      %s157 = scalar_lea.vmem %s0, %s156
      %p158 = pneg %p35
      %p159 = pneg %p32
      %p160 = scmp.lt.s32.totalorder %s14, 1
      %s161 = scalar_select %p160, %s14, 1
      %s162 = smul.addr %s161, 5
      %s163 = smul.addr %s162, 8
      %s164 = scalar_lea.vmem %s1, %s163
      %p165 = pneg %p61
      %p166 = pneg %p58
      %p167 = pneg %p82
      %p168 = pneg %p79
      %p169 = pneg %p108
      %p170 = pneg %p105
      %p171 = scmp.lt.s32.totalorder %s14, 1
      %s172 = scalar_select %p171, %s14, 1
      %s173 = smul.addr %s172, 200
      %s174 = smul.addr %s173, 8
      %s175 = scalar_lea.vmem %s3, %s174
      %p176 = scmp.lt.s32.totalorder %s14, 1
      %s177 = scalar_select %p176, %s14, 1
      %s178 = smul.addr %s177, 5
      %s179 = smul.addr %s178, 8
      %s180 = scalar_lea.vmem %s0, %s179
      %p181 = scmp.lt.s32.totalorder %s14, 1
      %s182 = scalar_select %p181, %s14, 1
      %s183 = smul.addr %s182, 5
      %s184 = smul.addr %s183, 8
      %s185 = scalar_lea.vmem %s1, %s184
      %p186 = scmp.lt.s32.totalorder %s14, 1
      %s187 = scalar_select %p186, %s14, 1
      %s188 = smul.addr %s187, 200
      %s189 = smul.addr %s188, 8
      %s190 = scalar_lea.vmem %s3, %s189
      %v191 = vld [vmem:[%s180] sm:$0xff]
      %v192 = vld [vmem:[%s180 + $0x8] sm:$0xff]
      %v193 = vld [vmem:[%s180 + $0x10] sm:$0xff]
      %v194 = vld [vmem:[%s180 + $0x18] sm:$0xff]
      %v195 = vld [vmem:[%s180 + $0x20] sm:$0xff]
      %v196 = vld [vmem:[%s185] sm:$0xff]
      %v197 = vld [vmem:[%s185 + $0x8] sm:$0xff]
      %v198 = vld [vmem:[%s185 + $0x10] sm:$0xff]
      %v199 = vld [vmem:[%s185 + $0x18] sm:$0xff]
      %v200 = vld [vmem:[%s185 + $0x20] sm:$0xff]
      %v206 = vcombine.high %v191, %v191
      %v208 = vunpack.c.l.s4 1966171168
      %v209 = vunpack.c.0.s8 %v208
      %v210 = vlaneseq
      %v211 = vshrl.u32 %v210, 7
      %v212 = vsub.s32 %v209, %v211
      %v213 = vrot.slane %v191, %v212
      %v215 = vunpack.c.l.s4 1966171168
      %v216 = vunpack.c.0.s8 %v215
      %v217 = vlaneseq
      %v218 = vshrl.u32 %v217, 7
      %v219 = vsub.s32 %v216, %v218
      %v220 = vrot.slane %v206, %v219
      %v221 = vcombine.high %v213, %v213
      %v222 = vcombine.high %v220, %v220
      %v224 = vunpack.c.l.s4 1966171168
      %v225 = vunpack.c.0.s8 %v224
      %v226 = vlaneseq
      %v227 = vshrl.u32 %v226, 7
      %v228 = vsub.s32 %v225, %v227
      %v229 = vrot.slane %v213, %v228
      %v231 = vunpack.c.l.s4 1966171168
      %v232 = vunpack.c.0.s8 %v231
      %v233 = vlaneseq
      %v234 = vshrl.u32 %v233, 7
      %v235 = vsub.s32 %v232, %v234
      %v236 = vrot.slane %v220, %v235
      %v238 = vunpack.c.l.s4 1966171168
      %v239 = vunpack.c.0.s8 %v238
      %v240 = vlaneseq
      %v241 = vshrl.u32 %v240, 7
      %v242 = vsub.s32 %v239, %v241
      %v243 = vrot.slane %v221, %v242
      %v245 = vunpack.c.l.s4 1966171168
      %v246 = vunpack.c.0.s8 %v245
      %v247 = vlaneseq
      %v248 = vshrl.u32 %v247, 7
      %v249 = vsub.s32 %v246, %v248
      %v250 = vrot.slane %v222, %v249
      %v251 = vcombine.high %v229, %v229
      %v252 = vcombine.high %v236, %v236
      %v253 = vcombine.high %v243, %v243
      %v254 = vcombine.high %v250, %v250
      %v255 = vcombine.high %v192, %v192
      %v257 = vunpack.c.l.s4 1966171168
      %v258 = vunpack.c.0.s8 %v257
      %v259 = vlaneseq
      %v260 = vshrl.u32 %v259, 7
      %v261 = vsub.s32 %v258, %v260
      %v262 = vrot.slane %v192, %v261
      %v264 = vunpack.c.l.s4 1966171168
      %v265 = vunpack.c.0.s8 %v264
      %v266 = vlaneseq
      %v267 = vshrl.u32 %v266, 7
      %v268 = vsub.s32 %v265, %v267
      %v269 = vrot.slane %v255, %v268
      %v270 = vcombine.high %v262, %v262
      %v271 = vcombine.high %v269, %v269
      %v273 = vunpack.c.l.s4 1966171168
      %v274 = vunpack.c.0.s8 %v273
      %v275 = vlaneseq
      %v276 = vshrl.u32 %v275, 7
      %v277 = vsub.s32 %v274, %v276
      %v278 = vrot.slane %v262, %v277
      %v280 = vunpack.c.l.s4 1966171168
      %v281 = vunpack.c.0.s8 %v280
      %v282 = vlaneseq
      %v283 = vshrl.u32 %v282, 7
      %v284 = vsub.s32 %v281, %v283
      %v285 = vrot.slane %v269, %v284
      %v287 = vunpack.c.l.s4 1966171168
      %v288 = vunpack.c.0.s8 %v287
      %v289 = vlaneseq
      %v290 = vshrl.u32 %v289, 7
      %v291 = vsub.s32 %v288, %v290
      %v292 = vrot.slane %v270, %v291
      %v294 = vunpack.c.l.s4 1966171168
      %v295 = vunpack.c.0.s8 %v294
      %v296 = vlaneseq
      %v297 = vshrl.u32 %v296, 7
      %v298 = vsub.s32 %v295, %v297
      %v299 = vrot.slane %v271, %v298
      %v300 = vcombine.high %v278, %v278
      %v301 = vcombine.high %v285, %v285
      %v302 = vcombine.high %v292, %v292
      %v303 = vcombine.high %v299, %v299
      %v304 = vcombine.high %v193, %v193
      %v306 = vunpack.c.l.s4 1966171168
      %v307 = vunpack.c.0.s8 %v306
      %v308 = vlaneseq
      %v309 = vshrl.u32 %v308, 7
      %v310 = vsub.s32 %v307, %v309
      %v311 = vrot.slane %v193, %v310
      %v313 = vunpack.c.l.s4 1966171168
      %v314 = vunpack.c.0.s8 %v313
      %v315 = vlaneseq
      %v316 = vshrl.u32 %v315, 7
      %v317 = vsub.s32 %v314, %v316
      %v318 = vrot.slane %v304, %v317
      %v319 = vcombine.high %v311, %v311
      %v320 = vcombine.high %v318, %v318
      %v322 = vunpack.c.l.s4 1966171168
      %v323 = vunpack.c.0.s8 %v322
      %v324 = vlaneseq
      %v325 = vshrl.u32 %v324, 7
      %v326 = vsub.s32 %v323, %v325
      %v327 = vrot.slane %v311, %v326
      %v329 = vunpack.c.l.s4 1966171168
      %v330 = vunpack.c.0.s8 %v329
      %v331 = vlaneseq
      %v332 = vshrl.u32 %v331, 7
      %v333 = vsub.s32 %v330, %v332
      %v334 = vrot.slane %v318, %v333
      %v336 = vunpack.c.l.s4 1966171168
      %v337 = vunpack.c.0.s8 %v336
      %v338 = vlaneseq
      %v339 = vshrl.u32 %v338, 7
      %v340 = vsub.s32 %v337, %v339
      %v341 = vrot.slane %v319, %v340
      %v343 = vunpack.c.l.s4 1966171168
      %v344 = vunpack.c.0.s8 %v343
      %v345 = vlaneseq
      %v346 = vshrl.u32 %v345, 7
      %v347 = vsub.s32 %v344, %v346
      %v348 = vrot.slane %v320, %v347
      %v349 = vcombine.high %v327, %v327
      %v350 = vcombine.high %v334, %v334
      %v351 = vcombine.high %v341, %v341
      %v352 = vcombine.high %v348, %v348
      %v353 = vcombine.high %v194, %v194
      %v355 = vunpack.c.l.s4 1966171168
      %v356 = vunpack.c.0.s8 %v355
      %v357 = vlaneseq
      %v358 = vshrl.u32 %v357, 7
      %v359 = vsub.s32 %v356, %v358
      %v360 = vrot.slane %v194, %v359
      %v362 = vunpack.c.l.s4 1966171168
      %v363 = vunpack.c.0.s8 %v362
      %v364 = vlaneseq
      %v365 = vshrl.u32 %v364, 7
      %v366 = vsub.s32 %v363, %v365
      %v367 = vrot.slane %v353, %v366
      %v368 = vcombine.high %v360, %v360
      %v369 = vcombine.high %v367, %v367
      %v371 = vunpack.c.l.s4 1966171168
      %v372 = vunpack.c.0.s8 %v371
      %v373 = vlaneseq
      %v374 = vshrl.u32 %v373, 7
      %v375 = vsub.s32 %v372, %v374
      %v376 = vrot.slane %v360, %v375
      %v378 = vunpack.c.l.s4 1966171168
      %v379 = vunpack.c.0.s8 %v378
      %v380 = vlaneseq
      %v381 = vshrl.u32 %v380, 7
      %v382 = vsub.s32 %v379, %v381
      %v383 = vrot.slane %v367, %v382
      %v385 = vunpack.c.l.s4 1966171168
      %v386 = vunpack.c.0.s8 %v385
      %v387 = vlaneseq
      %v388 = vshrl.u32 %v387, 7
      %v389 = vsub.s32 %v386, %v388
      %v390 = vrot.slane %v368, %v389
      %v392 = vunpack.c.l.s4 1966171168
      %v393 = vunpack.c.0.s8 %v392
      %v394 = vlaneseq
      %v395 = vshrl.u32 %v394, 7
      %v396 = vsub.s32 %v393, %v395
      %v397 = vrot.slane %v369, %v396
      %v398 = vcombine.high %v376, %v376
      %v399 = vcombine.high %v383, %v383
      %v400 = vcombine.high %v390, %v390
      %v401 = vcombine.high %v397, %v397
      %v402 = vcombine.high %v195, %v195
      %v404 = vunpack.c.l.s4 1966171168
      %v405 = vunpack.c.0.s8 %v404
      %v406 = vlaneseq
      %v407 = vshrl.u32 %v406, 7
      %v408 = vsub.s32 %v405, %v407
      %v409 = vrot.slane %v195, %v408
      %v411 = vunpack.c.l.s4 1966171168
      %v412 = vunpack.c.0.s8 %v411
      %v413 = vlaneseq
      %v414 = vshrl.u32 %v413, 7
      %v415 = vsub.s32 %v412, %v414
      %v416 = vrot.slane %v402, %v415
      %v417 = vcombine.high %v409, %v409
      %v418 = vcombine.high %v416, %v416
      %v420 = vunpack.c.l.s4 1966171168
      %v421 = vunpack.c.0.s8 %v420
      %v422 = vlaneseq
      %v423 = vshrl.u32 %v422, 7
      %v424 = vsub.s32 %v421, %v423
      %v425 = vrot.slane %v409, %v424
      %v427 = vunpack.c.l.s4 1966171168
      %v428 = vunpack.c.0.s8 %v427
      %v429 = vlaneseq
      %v430 = vshrl.u32 %v429, 7
      %v431 = vsub.s32 %v428, %v430
      %v432 = vrot.slane %v416, %v431
      %v434 = vunpack.c.l.s4 1966171168
      %v435 = vunpack.c.0.s8 %v434
      %v436 = vlaneseq
      %v437 = vshrl.u32 %v436, 7
      %v438 = vsub.s32 %v435, %v437
      %v439 = vrot.slane %v417, %v438
      %v441 = vunpack.c.l.s4 1966171168
      %v442 = vunpack.c.0.s8 %v441
      %v443 = vlaneseq
      %v444 = vshrl.u32 %v443, 7
      %v445 = vsub.s32 %v442, %v444
      %v446 = vrot.slane %v418, %v445
      %v447 = vcombine.high %v425, %v425
      %v448 = vcombine.high %v432, %v432
      %v449 = vcombine.high %v439, %v439
      %v450 = vcombine.high %v446, %v446
      %v451 = vlaneseq
      %v452 = vshrl.u32 %v451, 7
      %v453 = vsub.s32 0, %v452
      %v454 = vrot.slane %v229, %v453
      %v455 = vlaneseq
      %v456 = vshrl.u32 %v455, 7
      %v457 = vsub.s32 0, %v456
      %v458 = vrot.slane %v243, %v457
      %v459 = vlaneseq
      %v460 = vshrl.u32 %v459, 7
      %v461 = vsub.s32 0, %v460
      %v462 = vrot.slane %v251, %v461
      %v463 = vlaneseq
      %v464 = vshrl.u32 %v463, 7
      %v465 = vsub.s32 0, %v464
      %v466 = vrot.slane %v253, %v465
      %v467 = vlaneseq
      %v468 = vshrl.u32 %v467, 7
      %v469 = vsub.s32 0, %v468
      %v470 = vrot.slane %v236, %v469
      %v471 = vlaneseq
      %v472 = vshrl.u32 %v471, 7
      %v473 = vsub.s32 0, %v472
      %v474 = vrot.slane %v250, %v473
      %v475 = vlaneseq
      %v476 = vshrl.u32 %v475, 7
      %v477 = vsub.s32 0, %v476
      %v478 = vrot.slane %v252, %v477
      %v479 = vlaneseq
      %v480 = vshrl.u32 %v479, 7
      %v481 = vsub.s32 0, %v480
      %v482 = vrot.slane %v254, %v481
      %v483 = vlaneseq
      %v484 = vshrl.u32 %v483, 7
      %v485 = vsub.s32 0, %v484
      %v486 = vrot.slane %v278, %v485
      %v487 = vlaneseq
      %v488 = vshrl.u32 %v487, 7
      %v489 = vsub.s32 0, %v488
      %v490 = vrot.slane %v292, %v489
      %v491 = vlaneseq
      %v492 = vshrl.u32 %v491, 7
      %v493 = vsub.s32 0, %v492
      %v494 = vrot.slane %v300, %v493
      %v495 = vlaneseq
      %v496 = vshrl.u32 %v495, 7
      %v497 = vsub.s32 0, %v496
      %v498 = vrot.slane %v302, %v497
      %v499 = vlaneseq
      %v500 = vshrl.u32 %v499, 7
      %v501 = vsub.s32 0, %v500
      %v502 = vrot.slane %v285, %v501
      %v503 = vlaneseq
      %v504 = vshrl.u32 %v503, 7
      %v505 = vsub.s32 0, %v504
      %v506 = vrot.slane %v299, %v505
      %v507 = vlaneseq
      %v508 = vshrl.u32 %v507, 7
      %v509 = vsub.s32 0, %v508
      %v510 = vrot.slane %v301, %v509
      %v511 = vlaneseq
      %v512 = vshrl.u32 %v511, 7
      %v513 = vsub.s32 0, %v512
      %v514 = vrot.slane %v303, %v513
      %v515 = vlaneseq
      %v516 = vshrl.u32 %v515, 7
      %v517 = vsub.s32 0, %v516
      %v518 = vrot.slane %v327, %v517
      %v519 = vlaneseq
      %v520 = vshrl.u32 %v519, 7
      %v521 = vsub.s32 0, %v520
      %v522 = vrot.slane %v341, %v521
      %v523 = vlaneseq
      %v524 = vshrl.u32 %v523, 7
      %v525 = vsub.s32 0, %v524
      %v526 = vrot.slane %v349, %v525
      %v527 = vlaneseq
      %v528 = vshrl.u32 %v527, 7
      %v529 = vsub.s32 0, %v528
      %v530 = vrot.slane %v351, %v529
      %v531 = vlaneseq
      %v532 = vshrl.u32 %v531, 7
      %v533 = vsub.s32 0, %v532
      %v534 = vrot.slane %v334, %v533
      %v535 = vlaneseq
      %v536 = vshrl.u32 %v535, 7
      %v537 = vsub.s32 0, %v536
      %v538 = vrot.slane %v348, %v537
      %v539 = vlaneseq
      %v540 = vshrl.u32 %v539, 7
      %v541 = vsub.s32 0, %v540
      %v542 = vrot.slane %v350, %v541
      %v543 = vlaneseq
      %v544 = vshrl.u32 %v543, 7
      %v545 = vsub.s32 0, %v544
      %v546 = vrot.slane %v352, %v545
      %v547 = vlaneseq
      %v548 = vshrl.u32 %v547, 7
      %v549 = vsub.s32 0, %v548
      %v550 = vrot.slane %v376, %v549
      %v551 = vlaneseq
      %v552 = vshrl.u32 %v551, 7
      %v553 = vsub.s32 0, %v552
      %v554 = vrot.slane %v390, %v553
      %v555 = vlaneseq
      %v556 = vshrl.u32 %v555, 7
      %v557 = vsub.s32 0, %v556
      %v558 = vrot.slane %v398, %v557
      %v559 = vlaneseq
      %v560 = vshrl.u32 %v559, 7
      %v561 = vsub.s32 0, %v560
      %v562 = vrot.slane %v400, %v561
      %v563 = vlaneseq
      %v564 = vshrl.u32 %v563, 7
      %v565 = vsub.s32 0, %v564
      %v566 = vrot.slane %v383, %v565
      %v567 = vlaneseq
      %v568 = vshrl.u32 %v567, 7
      %v569 = vsub.s32 0, %v568
      %v570 = vrot.slane %v397, %v569
      %v571 = vlaneseq
      %v572 = vshrl.u32 %v571, 7
      %v573 = vsub.s32 0, %v572
      %v574 = vrot.slane %v399, %v573
      %v575 = vlaneseq
      %v576 = vshrl.u32 %v575, 7
      %v577 = vsub.s32 0, %v576
      %v578 = vrot.slane %v401, %v577
      %v579 = vlaneseq
      %v580 = vshrl.u32 %v579, 7
      %v581 = vsub.s32 0, %v580
      %v582 = vrot.slane %v425, %v581
      %v583 = vlaneseq
      %v584 = vshrl.u32 %v583, 7
      %v585 = vsub.s32 0, %v584
      %v586 = vrot.slane %v439, %v585
      %v587 = vlaneseq
      %v588 = vshrl.u32 %v587, 7
      %v589 = vsub.s32 0, %v588
      %v590 = vrot.slane %v447, %v589
      %v591 = vlaneseq
      %v592 = vshrl.u32 %v591, 7
      %v593 = vsub.s32 0, %v592
      %v594 = vrot.slane %v449, %v593
      %v595 = vlaneseq
      %v596 = vshrl.u32 %v595, 7
      %v597 = vsub.s32 0, %v596
      %v598 = vrot.slane %v432, %v597
      %v599 = vlaneseq
      %v600 = vshrl.u32 %v599, 7
      %v601 = vsub.s32 0, %v600
      %v602 = vrot.slane %v446, %v601
      %v603 = vlaneseq
      %v604 = vshrl.u32 %v603, 7
      %v605 = vsub.s32 0, %v604
      %v606 = vrot.slane %v448, %v605
      %v607 = vlaneseq
      %v608 = vshrl.u32 %v607, 7
      %v609 = vsub.s32 0, %v608
      %v610 = vrot.slane %v450, %v609
      %v651 = vadd.f32 %v454, %v196
      %v652 = vadd.f32 %v454, %v197
      %v653 = vadd.f32 %v454, %v198
      %v654 = vadd.f32 %v454, %v199
      %v655 = vadd.f32 %v454, %v200
      %v656 = vadd.f32 %v458, %v196
      %v657 = vadd.f32 %v458, %v197
      %v658 = vadd.f32 %v458, %v198
      %v659 = vadd.f32 %v458, %v199
      %v660 = vadd.f32 %v458, %v200
      %v661 = vadd.f32 %v462, %v196
      %v662 = vadd.f32 %v462, %v197
      %v663 = vadd.f32 %v462, %v198
      %v664 = vadd.f32 %v462, %v199
      %v665 = vadd.f32 %v462, %v200
      %v666 = vadd.f32 %v466, %v196
      %v667 = vadd.f32 %v466, %v197
      %v668 = vadd.f32 %v466, %v198
      %v669 = vadd.f32 %v466, %v199
      %v670 = vadd.f32 %v466, %v200
      %v671 = vadd.f32 %v470, %v196
      %v672 = vadd.f32 %v470, %v197
      %v673 = vadd.f32 %v470, %v198
      %v674 = vadd.f32 %v470, %v199
      %v675 = vadd.f32 %v470, %v200
      %v676 = vadd.f32 %v474, %v196
      %v677 = vadd.f32 %v474, %v197
      %v678 = vadd.f32 %v474, %v198
      %v679 = vadd.f32 %v474, %v199
      %v680 = vadd.f32 %v474, %v200
      %v681 = vadd.f32 %v478, %v196
      %v682 = vadd.f32 %v478, %v197
      %v683 = vadd.f32 %v478, %v198
      %v684 = vadd.f32 %v478, %v199
      %v685 = vadd.f32 %v478, %v200
      %v686 = vadd.f32 %v482, %v196
      %v687 = vadd.f32 %v482, %v197
      %v688 = vadd.f32 %v482, %v198
      %v689 = vadd.f32 %v482, %v199
      %v690 = vadd.f32 %v482, %v200
      %v691 = vadd.f32 %v486, %v196
      %v692 = vadd.f32 %v486, %v197
      %v693 = vadd.f32 %v486, %v198
      %v694 = vadd.f32 %v486, %v199
      %v695 = vadd.f32 %v486, %v200
      %v696 = vadd.f32 %v490, %v196
      %v697 = vadd.f32 %v490, %v197
      %v698 = vadd.f32 %v490, %v198
      %v699 = vadd.f32 %v490, %v199
      %v700 = vadd.f32 %v490, %v200
      %v701 = vadd.f32 %v494, %v196
      %v702 = vadd.f32 %v494, %v197
      %v703 = vadd.f32 %v494, %v198
      %v704 = vadd.f32 %v494, %v199
      %v705 = vadd.f32 %v494, %v200
      %v706 = vadd.f32 %v498, %v196
      %v707 = vadd.f32 %v498, %v197
      %v708 = vadd.f32 %v498, %v198
      %v709 = vadd.f32 %v498, %v199
      %v710 = vadd.f32 %v498, %v200
      %v711 = vadd.f32 %v502, %v196
      %v712 = vadd.f32 %v502, %v197
      %v713 = vadd.f32 %v502, %v198
      %v714 = vadd.f32 %v502, %v199
      %v715 = vadd.f32 %v502, %v200
      %v716 = vadd.f32 %v506, %v196
      %v717 = vadd.f32 %v506, %v197
      %v718 = vadd.f32 %v506, %v198
      %v719 = vadd.f32 %v506, %v199
      %v720 = vadd.f32 %v506, %v200
      %v721 = vadd.f32 %v510, %v196
      %v722 = vadd.f32 %v510, %v197
      %v723 = vadd.f32 %v510, %v198
      %v724 = vadd.f32 %v510, %v199
      %v725 = vadd.f32 %v510, %v200
      %v726 = vadd.f32 %v514, %v196
      %v727 = vadd.f32 %v514, %v197
      %v728 = vadd.f32 %v514, %v198
      %v729 = vadd.f32 %v514, %v199
      %v730 = vadd.f32 %v514, %v200
      %v731 = vadd.f32 %v518, %v196
      %v732 = vadd.f32 %v518, %v197
      %v733 = vadd.f32 %v518, %v198
      %v734 = vadd.f32 %v518, %v199
      %v735 = vadd.f32 %v518, %v200
      %v736 = vadd.f32 %v522, %v196
      %v737 = vadd.f32 %v522, %v197
      %v738 = vadd.f32 %v522, %v198
      %v739 = vadd.f32 %v522, %v199
      %v740 = vadd.f32 %v522, %v200
      %v741 = vadd.f32 %v526, %v196
      %v742 = vadd.f32 %v526, %v197
      %v743 = vadd.f32 %v526, %v198
      %v744 = vadd.f32 %v526, %v199
      %v745 = vadd.f32 %v526, %v200
      %v746 = vadd.f32 %v530, %v196
      %v747 = vadd.f32 %v530, %v197
      %v748 = vadd.f32 %v530, %v198
      %v749 = vadd.f32 %v530, %v199
      %v750 = vadd.f32 %v530, %v200
      %v751 = vadd.f32 %v534, %v196
      %v752 = vadd.f32 %v534, %v197
      %v753 = vadd.f32 %v534, %v198
      %v754 = vadd.f32 %v534, %v199
      %v755 = vadd.f32 %v534, %v200
      %v756 = vadd.f32 %v538, %v196
      %v757 = vadd.f32 %v538, %v197
      %v758 = vadd.f32 %v538, %v198
      %v759 = vadd.f32 %v538, %v199
      %v760 = vadd.f32 %v538, %v200
      %v761 = vadd.f32 %v542, %v196
      %v762 = vadd.f32 %v542, %v197
      %v763 = vadd.f32 %v542, %v198
      %v764 = vadd.f32 %v542, %v199
      %v765 = vadd.f32 %v542, %v200
      %v766 = vadd.f32 %v546, %v196
      %v767 = vadd.f32 %v546, %v197
      %v768 = vadd.f32 %v546, %v198
      %v769 = vadd.f32 %v546, %v199
      %v770 = vadd.f32 %v546, %v200
      %v771 = vadd.f32 %v550, %v196
      %v772 = vadd.f32 %v550, %v197
      %v773 = vadd.f32 %v550, %v198
      %v774 = vadd.f32 %v550, %v199
      %v775 = vadd.f32 %v550, %v200
      %v776 = vadd.f32 %v554, %v196
      %v777 = vadd.f32 %v554, %v197
      %v778 = vadd.f32 %v554, %v198
      %v779 = vadd.f32 %v554, %v199
      %v780 = vadd.f32 %v554, %v200
      %v781 = vadd.f32 %v558, %v196
      %v782 = vadd.f32 %v558, %v197
      %v783 = vadd.f32 %v558, %v198
      %v784 = vadd.f32 %v558, %v199
      %v785 = vadd.f32 %v558, %v200
      %v786 = vadd.f32 %v562, %v196
      %v787 = vadd.f32 %v562, %v197
      %v788 = vadd.f32 %v562, %v198
      %v789 = vadd.f32 %v562, %v199
      %v790 = vadd.f32 %v562, %v200
      %v791 = vadd.f32 %v566, %v196
      %v792 = vadd.f32 %v566, %v197
      %v793 = vadd.f32 %v566, %v198
      %v794 = vadd.f32 %v566, %v199
      %v795 = vadd.f32 %v566, %v200
      %v796 = vadd.f32 %v570, %v196
      %v797 = vadd.f32 %v570, %v197
      %v798 = vadd.f32 %v570, %v198
      %v799 = vadd.f32 %v570, %v199
      %v800 = vadd.f32 %v570, %v200
      %v801 = vadd.f32 %v574, %v196
      %v802 = vadd.f32 %v574, %v197
      %v803 = vadd.f32 %v574, %v198
      %v804 = vadd.f32 %v574, %v199
      %v805 = vadd.f32 %v574, %v200
      %v806 = vadd.f32 %v578, %v196
      %v807 = vadd.f32 %v578, %v197
      %v808 = vadd.f32 %v578, %v198
      %v809 = vadd.f32 %v578, %v199
      %v810 = vadd.f32 %v578, %v200
      %v811 = vadd.f32 %v582, %v196
      %v812 = vadd.f32 %v582, %v197
      %v813 = vadd.f32 %v582, %v198
      %v814 = vadd.f32 %v582, %v199
      %v815 = vadd.f32 %v582, %v200
      %v816 = vadd.f32 %v586, %v196
      %v817 = vadd.f32 %v586, %v197
      %v818 = vadd.f32 %v586, %v198
      %v819 = vadd.f32 %v586, %v199
      %v820 = vadd.f32 %v586, %v200
      %v821 = vadd.f32 %v590, %v196
      %v822 = vadd.f32 %v590, %v197
      %v823 = vadd.f32 %v590, %v198
      %v824 = vadd.f32 %v590, %v199
      %v825 = vadd.f32 %v590, %v200
      %v826 = vadd.f32 %v594, %v196
      %v827 = vadd.f32 %v594, %v197
      %v828 = vadd.f32 %v594, %v198
      %v829 = vadd.f32 %v594, %v199
      %v830 = vadd.f32 %v594, %v200
      %v831 = vadd.f32 %v598, %v196
      %v832 = vadd.f32 %v598, %v197
      %v833 = vadd.f32 %v598, %v198
      %v834 = vadd.f32 %v598, %v199
      %v835 = vadd.f32 %v598, %v200
      %v836 = vadd.f32 %v602, %v196
      %v837 = vadd.f32 %v602, %v197
      %v838 = vadd.f32 %v602, %v198
      %v839 = vadd.f32 %v602, %v199
      %v840 = vadd.f32 %v602, %v200
      %v841 = vadd.f32 %v606, %v196
      %v842 = vadd.f32 %v606, %v197
      %v843 = vadd.f32 %v606, %v198
      %v844 = vadd.f32 %v606, %v199
      %v845 = vadd.f32 %v606, %v200
      %v846 = vadd.f32 %v610, %v196
      %v847 = vadd.f32 %v610, %v197
      %v848 = vadd.f32 %v610, %v198
      %v849 = vadd.f32 %v610, %v199
      %v850 = vadd.f32 %v610, %v200
      %v851 = vld [vmem:[%s2] sm:$0xff]
      %v852 = vld [vmem:[%s2 + $0x8] sm:$0xff]
      %v853 = vld [vmem:[%s2 + $0x10] sm:$0xff]
      %v854 = vld [vmem:[%s2 + $0x18] sm:$0xff]
      %v855 = vld [vmem:[%s2 + $0x20] sm:$0xff]
      %v856 = vld [vmem:[%s2 + $0x28] sm:$0xff]
      %v857 = vld [vmem:[%s2 + $0x30] sm:$0xff]
      %v858 = vld [vmem:[%s2 + $0x38] sm:$0xff]
      %v859 = vld [vmem:[%s2 + $0x40] sm:$0xff]
      %v860 = vld [vmem:[%s2 + $0x48] sm:$0xff]
      %v861 = vld [vmem:[%s2 + $0x50] sm:$0xff]
      %v862 = vld [vmem:[%s2 + $0x58] sm:$0xff]
      %v863 = vld [vmem:[%s2 + $0x60] sm:$0xff]
      %v864 = vld [vmem:[%s2 + $0x68] sm:$0xff]
      %v865 = vld [vmem:[%s2 + $0x70] sm:$0xff]
      %v866 = vld [vmem:[%s2 + $0x78] sm:$0xff]
      %v867 = vld [vmem:[%s2 + $0x80] sm:$0xff]
      %v868 = vld [vmem:[%s2 + $0x88] sm:$0xff]
      %v869 = vld [vmem:[%s2 + $0x90] sm:$0xff]
      %v870 = vld [vmem:[%s2 + $0x98] sm:$0xff]
      %v871 = vld [vmem:[%s2 + $0xa0] sm:$0xff]
      %v872 = vld [vmem:[%s2 + $0xa8] sm:$0xff]
      %v873 = vld [vmem:[%s2 + $0xb0] sm:$0xff]
      %v874 = vld [vmem:[%s2 + $0xb8] sm:$0xff]
      %v875 = vld [vmem:[%s2 + $0xc0] sm:$0xff]
      %v876 = vld [vmem:[%s2 + $0xc8] sm:$0xff]
      %v877 = vld [vmem:[%s2 + $0xd0] sm:$0xff]
      %v878 = vld [vmem:[%s2 + $0xd8] sm:$0xff]
      %v879 = vld [vmem:[%s2 + $0xe0] sm:$0xff]
      %v880 = vld [vmem:[%s2 + $0xe8] sm:$0xff]
      %v881 = vld [vmem:[%s2 + $0xf0] sm:$0xff]
      %v882 = vld [vmem:[%s2 + $0xf8] sm:$0xff]
      %v883 = vld [vmem:[%s2 + $0x100] sm:$0xff]
      %v884 = vld [vmem:[%s2 + $0x108] sm:$0xff]
      %v885 = vld [vmem:[%s2 + $0x110] sm:$0xff]
      %v886 = vld [vmem:[%s2 + $0x118] sm:$0xff]
      %v887 = vld [vmem:[%s2 + $0x120] sm:$0xff]
      %v888 = vld [vmem:[%s2 + $0x128] sm:$0xff]
      %v889 = vld [vmem:[%s2 + $0x130] sm:$0xff]
      %v890 = vld [vmem:[%s2 + $0x138] sm:$0xff]
      %v891 = vld [vmem:[%s2 + $0x140] sm:$0xff]
      %v892 = vld [vmem:[%s2 + $0x148] sm:$0xff]
      %v893 = vld [vmem:[%s2 + $0x150] sm:$0xff]
      %v894 = vld [vmem:[%s2 + $0x158] sm:$0xff]
      %v895 = vld [vmem:[%s2 + $0x160] sm:$0xff]
      %v896 = vld [vmem:[%s2 + $0x168] sm:$0xff]
      %v897 = vld [vmem:[%s2 + $0x170] sm:$0xff]
      %v898 = vld [vmem:[%s2 + $0x178] sm:$0xff]
      %v899 = vld [vmem:[%s2 + $0x180] sm:$0xff]
      %v900 = vld [vmem:[%s2 + $0x188] sm:$0xff]
      %v901 = vld [vmem:[%s2 + $0x190] sm:$0xff]
      %v902 = vld [vmem:[%s2 + $0x198] sm:$0xff]
      %v903 = vld [vmem:[%s2 + $0x1a0] sm:$0xff]
      %v904 = vld [vmem:[%s2 + $0x1a8] sm:$0xff]
      %v905 = vld [vmem:[%s2 + $0x1b0] sm:$0xff]
      %v906 = vld [vmem:[%s2 + $0x1b8] sm:$0xff]
      %v907 = vld [vmem:[%s2 + $0x1c0] sm:$0xff]
      %v908 = vld [vmem:[%s2 + $0x1c8] sm:$0xff]
      %v909 = vld [vmem:[%s2 + $0x1d0] sm:$0xff]
      %v910 = vld [vmem:[%s2 + $0x1d8] sm:$0xff]
      %v911 = vld [vmem:[%s2 + $0x1e0] sm:$0xff]
      %v912 = vld [vmem:[%s2 + $0x1e8] sm:$0xff]
      %v913 = vld [vmem:[%s2 + $0x1f0] sm:$0xff]
      %v914 = vld [vmem:[%s2 + $0x1f8] sm:$0xff]
      %v915 = vld [vmem:[%s2 + $0x200] sm:$0xff]
      %v916 = vld [vmem:[%s2 + $0x208] sm:$0xff]
      %v917 = vld [vmem:[%s2 + $0x210] sm:$0xff]
      %v918 = vld [vmem:[%s2 + $0x218] sm:$0xff]
      %v919 = vld [vmem:[%s2 + $0x220] sm:$0xff]
      %v920 = vld [vmem:[%s2 + $0x228] sm:$0xff]
      %v921 = vld [vmem:[%s2 + $0x230] sm:$0xff]
      %v922 = vld [vmem:[%s2 + $0x238] sm:$0xff]
      %v923 = vld [vmem:[%s2 + $0x240] sm:$0xff]
      %v924 = vld [vmem:[%s2 + $0x248] sm:$0xff]
      %v925 = vld [vmem:[%s2 + $0x250] sm:$0xff]
      %v926 = vld [vmem:[%s2 + $0x258] sm:$0xff]
      %v927 = vld [vmem:[%s2 + $0x260] sm:$0xff]
      %v928 = vld [vmem:[%s2 + $0x268] sm:$0xff]
      %v929 = vld [vmem:[%s2 + $0x270] sm:$0xff]
      %v930 = vld [vmem:[%s2 + $0x278] sm:$0xff]
      %v931 = vld [vmem:[%s2 + $0x280] sm:$0xff]
      %v932 = vld [vmem:[%s2 + $0x288] sm:$0xff]
      %v933 = vld [vmem:[%s2 + $0x290] sm:$0xff]
      %v934 = vld [vmem:[%s2 + $0x298] sm:$0xff]
      %v935 = vld [vmem:[%s2 + $0x2a0] sm:$0xff]
      %v936 = vld [vmem:[%s2 + $0x2a8] sm:$0xff]
      %v937 = vld [vmem:[%s2 + $0x2b0] sm:$0xff]
      %v938 = vld [vmem:[%s2 + $0x2b8] sm:$0xff]
      %v939 = vld [vmem:[%s2 + $0x2c0] sm:$0xff]
      %v940 = vld [vmem:[%s2 + $0x2c8] sm:$0xff]
      %v941 = vld [vmem:[%s2 + $0x2d0] sm:$0xff]
      %v942 = vld [vmem:[%s2 + $0x2d8] sm:$0xff]
      %v943 = vld [vmem:[%s2 + $0x2e0] sm:$0xff]
      %v944 = vld [vmem:[%s2 + $0x2e8] sm:$0xff]
      %v945 = vld [vmem:[%s2 + $0x2f0] sm:$0xff]
      %v946 = vld [vmem:[%s2 + $0x2f8] sm:$0xff]
      %v947 = vld [vmem:[%s2 + $0x300] sm:$0xff]
      %v948 = vld [vmem:[%s2 + $0x308] sm:$0xff]
      %v949 = vld [vmem:[%s2 + $0x310] sm:$0xff]
      %v950 = vld [vmem:[%s2 + $0x318] sm:$0xff]
      %v951 = vld [vmem:[%s2 + $0x320] sm:$0xff]
      %v952 = vld [vmem:[%s2 + $0x328] sm:$0xff]
      %v953 = vld [vmem:[%s2 + $0x330] sm:$0xff]
      %v954 = vld [vmem:[%s2 + $0x338] sm:$0xff]
      %v955 = vld [vmem:[%s2 + $0x340] sm:$0xff]
      %v956 = vld [vmem:[%s2 + $0x348] sm:$0xff]
      %v957 = vld [vmem:[%s2 + $0x350] sm:$0xff]
      %v958 = vld [vmem:[%s2 + $0x358] sm:$0xff]
      %v959 = vld [vmem:[%s2 + $0x360] sm:$0xff]
      %v960 = vld [vmem:[%s2 + $0x368] sm:$0xff]
      %v961 = vld [vmem:[%s2 + $0x370] sm:$0xff]
      %v962 = vld [vmem:[%s2 + $0x378] sm:$0xff]
      %v963 = vld [vmem:[%s2 + $0x380] sm:$0xff]
      %v964 = vld [vmem:[%s2 + $0x388] sm:$0xff]
      %v965 = vld [vmem:[%s2 + $0x390] sm:$0xff]
      %v966 = vld [vmem:[%s2 + $0x398] sm:$0xff]
      %v967 = vld [vmem:[%s2 + $0x3a0] sm:$0xff]
      %v968 = vld [vmem:[%s2 + $0x3a8] sm:$0xff]
      %v969 = vld [vmem:[%s2 + $0x3b0] sm:$0xff]
      %v970 = vld [vmem:[%s2 + $0x3b8] sm:$0xff]
      %v971 = vld [vmem:[%s2 + $0x3c0] sm:$0xff]
      %v972 = vld [vmem:[%s2 + $0x3c8] sm:$0xff]
      %v973 = vld [vmem:[%s2 + $0x3d0] sm:$0xff]
      %v974 = vld [vmem:[%s2 + $0x3d8] sm:$0xff]
      %v975 = vld [vmem:[%s2 + $0x3e0] sm:$0xff]
      %v976 = vld [vmem:[%s2 + $0x3e8] sm:$0xff]
      %v977 = vld [vmem:[%s2 + $0x3f0] sm:$0xff]
      %v978 = vld [vmem:[%s2 + $0x3f8] sm:$0xff]
      %v979 = vld [vmem:[%s2 + $0x400] sm:$0xff]
      %v980 = vld [vmem:[%s2 + $0x408] sm:$0xff]
      %v981 = vld [vmem:[%s2 + $0x410] sm:$0xff]
      %v982 = vld [vmem:[%s2 + $0x418] sm:$0xff]
      %v983 = vld [vmem:[%s2 + $0x420] sm:$0xff]
      %v984 = vld [vmem:[%s2 + $0x428] sm:$0xff]
      %v985 = vld [vmem:[%s2 + $0x430] sm:$0xff]
      %v986 = vld [vmem:[%s2 + $0x438] sm:$0xff]
      %v987 = vld [vmem:[%s2 + $0x440] sm:$0xff]
      %v988 = vld [vmem:[%s2 + $0x448] sm:$0xff]
      %v989 = vld [vmem:[%s2 + $0x450] sm:$0xff]
      %v990 = vld [vmem:[%s2 + $0x458] sm:$0xff]
      %v991 = vld [vmem:[%s2 + $0x460] sm:$0xff]
      %v992 = vld [vmem:[%s2 + $0x468] sm:$0xff]
      %v993 = vld [vmem:[%s2 + $0x470] sm:$0xff]
      %v994 = vld [vmem:[%s2 + $0x478] sm:$0xff]
      %v995 = vld [vmem:[%s2 + $0x480] sm:$0xff]
      %v996 = vld [vmem:[%s2 + $0x488] sm:$0xff]
      %v997 = vld [vmem:[%s2 + $0x490] sm:$0xff]
      %v998 = vld [vmem:[%s2 + $0x498] sm:$0xff]
      %v999 = vld [vmem:[%s2 + $0x4a0] sm:$0xff]
      %v1000 = vld [vmem:[%s2 + $0x4a8] sm:$0xff]
      %v1001 = vld [vmem:[%s2 + $0x4b0] sm:$0xff]
      %v1002 = vld [vmem:[%s2 + $0x4b8] sm:$0xff]
      %v1003 = vld [vmem:[%s2 + $0x4c0] sm:$0xff]
      %v1004 = vld [vmem:[%s2 + $0x4c8] sm:$0xff]
      %v1005 = vld [vmem:[%s2 + $0x4d0] sm:$0xff]
      %v1006 = vld [vmem:[%s2 + $0x4d8] sm:$0xff]
      %v1007 = vld [vmem:[%s2 + $0x4e0] sm:$0xff]
      %v1008 = vld [vmem:[%s2 + $0x4e8] sm:$0xff]
      %v1009 = vld [vmem:[%s2 + $0x4f0] sm:$0xff]
      %v1010 = vld [vmem:[%s2 + $0x4f8] sm:$0xff]
      %v1011 = vld [vmem:[%s2 + $0x500] sm:$0xff]
      %v1012 = vld [vmem:[%s2 + $0x508] sm:$0xff]
      %v1013 = vld [vmem:[%s2 + $0x510] sm:$0xff]
      %v1014 = vld [vmem:[%s2 + $0x518] sm:$0xff]
      %v1015 = vld [vmem:[%s2 + $0x520] sm:$0xff]
      %v1016 = vld [vmem:[%s2 + $0x528] sm:$0xff]
      %v1017 = vld [vmem:[%s2 + $0x530] sm:$0xff]
      %v1018 = vld [vmem:[%s2 + $0x538] sm:$0xff]
      %v1019 = vld [vmem:[%s2 + $0x540] sm:$0xff]
      %v1020 = vld [vmem:[%s2 + $0x548] sm:$0xff]
      %v1021 = vld [vmem:[%s2 + $0x550] sm:$0xff]
      %v1022 = vld [vmem:[%s2 + $0x558] sm:$0xff]
      %v1023 = vld [vmem:[%s2 + $0x560] sm:$0xff]
      %v1024 = vld [vmem:[%s2 + $0x568] sm:$0xff]
      %v1025 = vld [vmem:[%s2 + $0x570] sm:$0xff]
      %v1026 = vld [vmem:[%s2 + $0x578] sm:$0xff]
      %v1027 = vld [vmem:[%s2 + $0x580] sm:$0xff]
      %v1028 = vld [vmem:[%s2 + $0x588] sm:$0xff]
      %v1029 = vld [vmem:[%s2 + $0x590] sm:$0xff]
      %v1030 = vld [vmem:[%s2 + $0x598] sm:$0xff]
      %v1031 = vld [vmem:[%s2 + $0x5a0] sm:$0xff]
      %v1032 = vld [vmem:[%s2 + $0x5a8] sm:$0xff]
      %v1033 = vld [vmem:[%s2 + $0x5b0] sm:$0xff]
      %v1034 = vld [vmem:[%s2 + $0x5b8] sm:$0xff]
      %v1035 = vld [vmem:[%s2 + $0x5c0] sm:$0xff]
      %v1036 = vld [vmem:[%s2 + $0x5c8] sm:$0xff]
      %v1037 = vld [vmem:[%s2 + $0x5d0] sm:$0xff]
      %v1038 = vld [vmem:[%s2 + $0x5d8] sm:$0xff]
      %v1039 = vld [vmem:[%s2 + $0x5e0] sm:$0xff]
      %v1040 = vld [vmem:[%s2 + $0x5e8] sm:$0xff]
      %v1041 = vld [vmem:[%s2 + $0x5f0] sm:$0xff]
      %v1042 = vld [vmem:[%s2 + $0x5f8] sm:$0xff]
      %v1043 = vld [vmem:[%s2 + $0x600] sm:$0xff]
      %v1044 = vld [vmem:[%s2 + $0x608] sm:$0xff]
      %v1045 = vld [vmem:[%s2 + $0x610] sm:$0xff]
      %v1046 = vld [vmem:[%s2 + $0x618] sm:$0xff]
      %v1047 = vld [vmem:[%s2 + $0x620] sm:$0xff]
      %v1048 = vld [vmem:[%s2 + $0x628] sm:$0xff]
      %v1049 = vld [vmem:[%s2 + $0x630] sm:$0xff]
      %v1050 = vld [vmem:[%s2 + $0x638] sm:$0xff]
      %v1051 = vadd.f32 %v651, %v851
      %v1052 = vadd.f32 %v652, %v852
      %v1053 = vadd.f32 %v653, %v853
      %v1054 = vadd.f32 %v654, %v854
      %v1055 = vadd.f32 %v655, %v855
      %v1056 = vadd.f32 %v656, %v856
      %v1057 = vadd.f32 %v657, %v857
      %v1058 = vadd.f32 %v658, %v858
      %v1059 = vadd.f32 %v659, %v859
      %v1060 = vadd.f32 %v660, %v860
      %v1061 = vadd.f32 %v661, %v861
      %v1062 = vadd.f32 %v662, %v862
      %v1063 = vadd.f32 %v663, %v863
      %v1064 = vadd.f32 %v664, %v864
      %v1065 = vadd.f32 %v665, %v865
      %v1066 = vadd.f32 %v666, %v866
      %v1067 = vadd.f32 %v667, %v867
      %v1068 = vadd.f32 %v668, %v868
      %v1069 = vadd.f32 %v669, %v869
      %v1070 = vadd.f32 %v670, %v870
      %v1071 = vadd.f32 %v671, %v871
      %v1072 = vadd.f32 %v672, %v872
      %v1073 = vadd.f32 %v673, %v873
      %v1074 = vadd.f32 %v674, %v874
      %v1075 = vadd.f32 %v675, %v875
      %v1076 = vadd.f32 %v676, %v876
      %v1077 = vadd.f32 %v677, %v877
      %v1078 = vadd.f32 %v678, %v878
      %v1079 = vadd.f32 %v679, %v879
      %v1080 = vadd.f32 %v680, %v880
      %v1081 = vadd.f32 %v681, %v881
      %v1082 = vadd.f32 %v682, %v882
      %v1083 = vadd.f32 %v683, %v883
      %v1084 = vadd.f32 %v684, %v884
      %v1085 = vadd.f32 %v685, %v885
      %v1086 = vadd.f32 %v686, %v886
      %v1087 = vadd.f32 %v687, %v887
      %v1088 = vadd.f32 %v688, %v888
      %v1089 = vadd.f32 %v689, %v889
      %v1090 = vadd.f32 %v690, %v890
      %v1091 = vadd.f32 %v691, %v891
      %v1092 = vadd.f32 %v692, %v892
      %v1093 = vadd.f32 %v693, %v893
      %v1094 = vadd.f32 %v694, %v894
      %v1095 = vadd.f32 %v695, %v895
      %v1096 = vadd.f32 %v696, %v896
      %v1097 = vadd.f32 %v697, %v897
      %v1098 = vadd.f32 %v698, %v898
      %v1099 = vadd.f32 %v699, %v899
      %v1100 = vadd.f32 %v700, %v900
      %v1101 = vadd.f32 %v701, %v901
      %v1102 = vadd.f32 %v702, %v902
      %v1103 = vadd.f32 %v703, %v903
      %v1104 = vadd.f32 %v704, %v904
      %v1105 = vadd.f32 %v705, %v905
      %v1106 = vadd.f32 %v706, %v906
      %v1107 = vadd.f32 %v707, %v907
      %v1108 = vadd.f32 %v708, %v908
      %v1109 = vadd.f32 %v709, %v909
      %v1110 = vadd.f32 %v710, %v910
      %v1111 = vadd.f32 %v711, %v911
      %v1112 = vadd.f32 %v712, %v912
      %v1113 = vadd.f32 %v713, %v913
      %v1114 = vadd.f32 %v714, %v914
      %v1115 = vadd.f32 %v715, %v915
      %v1116 = vadd.f32 %v716, %v916
      %v1117 = vadd.f32 %v717, %v917
      %v1118 = vadd.f32 %v718, %v918
      %v1119 = vadd.f32 %v719, %v919
      %v1120 = vadd.f32 %v720, %v920
      %v1121 = vadd.f32 %v721, %v921
      %v1122 = vadd.f32 %v722, %v922
      %v1123 = vadd.f32 %v723, %v923
      %v1124 = vadd.f32 %v724, %v924
      %v1125 = vadd.f32 %v725, %v925
      %v1126 = vadd.f32 %v726, %v926
      %v1127 = vadd.f32 %v727, %v927
      %v1128 = vadd.f32 %v728, %v928
      %v1129 = vadd.f32 %v729, %v929
      %v1130 = vadd.f32 %v730, %v930
      %v1131 = vadd.f32 %v731, %v931
      %v1132 = vadd.f32 %v732, %v932
      %v1133 = vadd.f32 %v733, %v933
      %v1134 = vadd.f32 %v734, %v934
      %v1135 = vadd.f32 %v735, %v935
      %v1136 = vadd.f32 %v736, %v936
      %v1137 = vadd.f32 %v737, %v937
      %v1138 = vadd.f32 %v738, %v938
      %v1139 = vadd.f32 %v739, %v939
      %v1140 = vadd.f32 %v740, %v940
      %v1141 = vadd.f32 %v741, %v941
      %v1142 = vadd.f32 %v742, %v942
      %v1143 = vadd.f32 %v743, %v943
      %v1144 = vadd.f32 %v744, %v944
      %v1145 = vadd.f32 %v745, %v945
      %v1146 = vadd.f32 %v746, %v946
      %v1147 = vadd.f32 %v747, %v947
      %v1148 = vadd.f32 %v748, %v948
      %v1149 = vadd.f32 %v749, %v949
      %v1150 = vadd.f32 %v750, %v950
      %v1151 = vadd.f32 %v751, %v951
      %v1152 = vadd.f32 %v752, %v952
      %v1153 = vadd.f32 %v753, %v953
      %v1154 = vadd.f32 %v754, %v954
      %v1155 = vadd.f32 %v755, %v955
      %v1156 = vadd.f32 %v756, %v956
      %v1157 = vadd.f32 %v757, %v957
      %v1158 = vadd.f32 %v758, %v958
      %v1159 = vadd.f32 %v759, %v959
      %v1160 = vadd.f32 %v760, %v960
      %v1161 = vadd.f32 %v761, %v961
      %v1162 = vadd.f32 %v762, %v962
      %v1163 = vadd.f32 %v763, %v963
      %v1164 = vadd.f32 %v764, %v964
      %v1165 = vadd.f32 %v765, %v965
      %v1166 = vadd.f32 %v766, %v966
      %v1167 = vadd.f32 %v767, %v967
      %v1168 = vadd.f32 %v768, %v968
      %v1169 = vadd.f32 %v769, %v969
      %v1170 = vadd.f32 %v770, %v970
      %v1171 = vadd.f32 %v771, %v971
      %v1172 = vadd.f32 %v772, %v972
      %v1173 = vadd.f32 %v773, %v973
      %v1174 = vadd.f32 %v774, %v974
      %v1175 = vadd.f32 %v775, %v975
      %v1176 = vadd.f32 %v776, %v976
      %v1177 = vadd.f32 %v777, %v977
      %v1178 = vadd.f32 %v778, %v978
      %v1179 = vadd.f32 %v779, %v979
      %v1180 = vadd.f32 %v780, %v980
      %v1181 = vadd.f32 %v781, %v981
      %v1182 = vadd.f32 %v782, %v982
      %v1183 = vadd.f32 %v783, %v983
      %v1184 = vadd.f32 %v784, %v984
      %v1185 = vadd.f32 %v785, %v985
      %v1186 = vadd.f32 %v786, %v986
      %v1187 = vadd.f32 %v787, %v987
      %v1188 = vadd.f32 %v788, %v988
      %v1189 = vadd.f32 %v789, %v989
      %v1190 = vadd.f32 %v790, %v990
      %v1191 = vadd.f32 %v791, %v991
      %v1192 = vadd.f32 %v792, %v992
      %v1193 = vadd.f32 %v793, %v993
      %v1194 = vadd.f32 %v794, %v994
      %v1195 = vadd.f32 %v795, %v995
      %v1196 = vadd.f32 %v796, %v996
      %v1197 = vadd.f32 %v797, %v997
      %v1198 = vadd.f32 %v798, %v998
      %v1199 = vadd.f32 %v799, %v999
      %v1200 = vadd.f32 %v800, %v1000
      %v1201 = vadd.f32 %v801, %v1001
      %v1202 = vadd.f32 %v802, %v1002
      %v1203 = vadd.f32 %v803, %v1003
      %v1204 = vadd.f32 %v804, %v1004
      %v1205 = vadd.f32 %v805, %v1005
      %v1206 = vadd.f32 %v806, %v1006
      %v1207 = vadd.f32 %v807, %v1007
      %v1208 = vadd.f32 %v808, %v1008
      %v1209 = vadd.f32 %v809, %v1009
      %v1210 = vadd.f32 %v810, %v1010
      %v1211 = vadd.f32 %v811, %v1011
      %v1212 = vadd.f32 %v812, %v1012
      %v1213 = vadd.f32 %v813, %v1013
      %v1214 = vadd.f32 %v814, %v1014
      %v1215 = vadd.f32 %v815, %v1015
      %v1216 = vadd.f32 %v816, %v1016
      %v1217 = vadd.f32 %v817, %v1017
      %v1218 = vadd.f32 %v818, %v1018
      %v1219 = vadd.f32 %v819, %v1019
      %v1220 = vadd.f32 %v820, %v1020
      %v1221 = vadd.f32 %v821, %v1021
      %v1222 = vadd.f32 %v822, %v1022
      %v1223 = vadd.f32 %v823, %v1023
      %v1224 = vadd.f32 %v824, %v1024
      %v1225 = vadd.f32 %v825, %v1025
      %v1226 = vadd.f32 %v826, %v1026
      %v1227 = vadd.f32 %v827, %v1027
      %v1228 = vadd.f32 %v828, %v1028
      %v1229 = vadd.f32 %v829, %v1029
      %v1230 = vadd.f32 %v830, %v1030
      %v1231 = vadd.f32 %v831, %v1031
      %v1232 = vadd.f32 %v832, %v1032
      %v1233 = vadd.f32 %v833, %v1033
      %v1234 = vadd.f32 %v834, %v1034
      %v1235 = vadd.f32 %v835, %v1035
      %v1236 = vadd.f32 %v836, %v1036
      %v1237 = vadd.f32 %v837, %v1037
      %v1238 = vadd.f32 %v838, %v1038
      %v1239 = vadd.f32 %v839, %v1039
      %v1240 = vadd.f32 %v840, %v1040
      %v1241 = vadd.f32 %v841, %v1041
      %v1242 = vadd.f32 %v842, %v1042
      %v1243 = vadd.f32 %v843, %v1043
      %v1244 = vadd.f32 %v844, %v1044
      %v1245 = vadd.f32 %v845, %v1045
      %v1246 = vadd.f32 %v846, %v1046
      %v1247 = vadd.f32 %v847, %v1047
      %v1248 = vadd.f32 %v848, %v1048
      %v1249 = vadd.f32 %v849, %v1049
      %v1250 = vadd.f32 %v850, %v1050
      %vm1251 = vcmask 261120
      %1252 = vst.msk [vmem:[%s190] sm:$0xff] %vm1251, %v1051
      %1253 = vst.msk [vmem:[%s190 + $0x8] sm:$0xff] %vm1251, %v1052
      %1254 = vst.msk [vmem:[%s190 + $0x10] sm:$0xff] %vm1251, %v1053
      %1255 = vst.msk [vmem:[%s190 + $0x18] sm:$0xff] %vm1251, %v1054
      %1256 = vst.msk [vmem:[%s190 + $0x20] sm:$0xff] %vm1251, %v1055
      %1257 = vst.msk [vmem:[%s190 + $0x28] sm:$0xff] %vm1251, %v1056
      %1258 = vst.msk [vmem:[%s190 + $0x30] sm:$0xff] %vm1251, %v1057
      %1259 = vst.msk [vmem:[%s190 + $0x38] sm:$0xff] %vm1251, %v1058
      %1260 = vst.msk [vmem:[%s190 + $0x40] sm:$0xff] %vm1251, %v1059
      %1261 = vst.msk [vmem:[%s190 + $0x48] sm:$0xff] %vm1251, %v1060
      %1262 = vst.msk [vmem:[%s190 + $0x50] sm:$0xff] %vm1251, %v1061
      %1263 = vst.msk [vmem:[%s190 + $0x58] sm:$0xff] %vm1251, %v1062
      %1264 = vst.msk [vmem:[%s190 + $0x60] sm:$0xff] %vm1251, %v1063
      %1265 = vst.msk [vmem:[%s190 + $0x68] sm:$0xff] %vm1251, %v1064
      %1266 = vst.msk [vmem:[%s190 + $0x70] sm:$0xff] %vm1251, %v1065
      %1267 = vst.msk [vmem:[%s190 + $0x78] sm:$0xff] %vm1251, %v1066
      %1268 = vst.msk [vmem:[%s190 + $0x80] sm:$0xff] %vm1251, %v1067
      %1269 = vst.msk [vmem:[%s190 + $0x88] sm:$0xff] %vm1251, %v1068
      %1270 = vst.msk [vmem:[%s190 + $0x90] sm:$0xff] %vm1251, %v1069
      %1271 = vst.msk [vmem:[%s190 + $0x98] sm:$0xff] %vm1251, %v1070
      %1272 = vst.msk [vmem:[%s190 + $0xa0] sm:$0xff] %vm1251, %v1071
      %1273 = vst.msk [vmem:[%s190 + $0xa8] sm:$0xff] %vm1251, %v1072
      %1274 = vst.msk [vmem:[%s190 + $0xb0] sm:$0xff] %vm1251, %v1073
      %1275 = vst.msk [vmem:[%s190 + $0xb8] sm:$0xff] %vm1251, %v1074
      %1276 = vst.msk [vmem:[%s190 + $0xc0] sm:$0xff] %vm1251, %v1075
      %1277 = vst.msk [vmem:[%s190 + $0xc8] sm:$0xff] %vm1251, %v1076
      %1278 = vst.msk [vmem:[%s190 + $0xd0] sm:$0xff] %vm1251, %v1077
      %1279 = vst.msk [vmem:[%s190 + $0xd8] sm:$0xff] %vm1251, %v1078
      %1280 = vst.msk [vmem:[%s190 + $0xe0] sm:$0xff] %vm1251, %v1079
      %1281 = vst.msk [vmem:[%s190 + $0xe8] sm:$0xff] %vm1251, %v1080
      %1282 = vst.msk [vmem:[%s190 + $0xf0] sm:$0xff] %vm1251, %v1081
      %1283 = vst.msk [vmem:[%s190 + $0xf8] sm:$0xff] %vm1251, %v1082
      %1284 = vst.msk [vmem:[%s190 + $0x100] sm:$0xff] %vm1251, %v1083
      %1285 = vst.msk [vmem:[%s190 + $0x108] sm:$0xff] %vm1251, %v1084
      %1286 = vst.msk [vmem:[%s190 + $0x110] sm:$0xff] %vm1251, %v1085
      %1287 = vst.msk [vmem:[%s190 + $0x118] sm:$0xff] %vm1251, %v1086
      %1288 = vst.msk [vmem:[%s190 + $0x120] sm:$0xff] %vm1251, %v1087
      %1289 = vst.msk [vmem:[%s190 + $0x128] sm:$0xff] %vm1251, %v1088
      %1290 = vst.msk [vmem:[%s190 + $0x130] sm:$0xff] %vm1251, %v1089
      %1291 = vst.msk [vmem:[%s190 + $0x138] sm:$0xff] %vm1251, %v1090
      %1292 = vst.msk [vmem:[%s190 + $0x140] sm:$0xff] %vm1251, %v1091
      %1293 = vst.msk [vmem:[%s190 + $0x148] sm:$0xff] %vm1251, %v1092
      %1294 = vst.msk [vmem:[%s190 + $0x150] sm:$0xff] %vm1251, %v1093
      %1295 = vst.msk [vmem:[%s190 + $0x158] sm:$0xff] %vm1251, %v1094
      %1296 = vst.msk [vmem:[%s190 + $0x160] sm:$0xff] %vm1251, %v1095
      %1297 = vst.msk [vmem:[%s190 + $0x168] sm:$0xff] %vm1251, %v1096
      %1298 = vst.msk [vmem:[%s190 + $0x170] sm:$0xff] %vm1251, %v1097
      %1299 = vst.msk [vmem:[%s190 + $0x178] sm:$0xff] %vm1251, %v1098
      %1300 = vst.msk [vmem:[%s190 + $0x180] sm:$0xff] %vm1251, %v1099
      %1301 = vst.msk [vmem:[%s190 + $0x188] sm:$0xff] %vm1251, %v1100
      %1302 = vst.msk [vmem:[%s190 + $0x190] sm:$0xff] %vm1251, %v1101
      %1303 = vst.msk [vmem:[%s190 + $0x198] sm:$0xff] %vm1251, %v1102
      %1304 = vst.msk [vmem:[%s190 + $0x1a0] sm:$0xff] %vm1251, %v1103
      %1305 = vst.msk [vmem:[%s190 + $0x1a8] sm:$0xff] %vm1251, %v1104
      %1306 = vst.msk [vmem:[%s190 + $0x1b0] sm:$0xff] %vm1251, %v1105
      %1307 = vst.msk [vmem:[%s190 + $0x1b8] sm:$0xff] %vm1251, %v1106
      %1308 = vst.msk [vmem:[%s190 + $0x1c0] sm:$0xff] %vm1251, %v1107
      %1309 = vst.msk [vmem:[%s190 + $0x1c8] sm:$0xff] %vm1251, %v1108
      %1310 = vst.msk [vmem:[%s190 + $0x1d0] sm:$0xff] %vm1251, %v1109
      %1311 = vst.msk [vmem:[%s190 + $0x1d8] sm:$0xff] %vm1251, %v1110
      %1312 = vst.msk [vmem:[%s190 + $0x1e0] sm:$0xff] %vm1251, %v1111
      %1313 = vst.msk [vmem:[%s190 + $0x1e8] sm:$0xff] %vm1251, %v1112
      %1314 = vst.msk [vmem:[%s190 + $0x1f0] sm:$0xff] %vm1251, %v1113
      %1315 = vst.msk [vmem:[%s190 + $0x1f8] sm:$0xff] %vm1251, %v1114
      %1316 = vst.msk [vmem:[%s190 + $0x200] sm:$0xff] %vm1251, %v1115
      %1317 = vst.msk [vmem:[%s190 + $0x208] sm:$0xff] %vm1251, %v1116
      %1318 = vst.msk [vmem:[%s190 + $0x210] sm:$0xff] %vm1251, %v1117
      %1319 = vst.msk [vmem:[%s190 + $0x218] sm:$0xff] %vm1251, %v1118
      %1320 = vst.msk [vmem:[%s190 + $0x220] sm:$0xff] %vm1251, %v1119
      %1321 = vst.msk [vmem:[%s190 + $0x228] sm:$0xff] %vm1251, %v1120
      %1322 = vst.msk [vmem:[%s190 + $0x230] sm:$0xff] %vm1251, %v1121
      %1323 = vst.msk [vmem:[%s190 + $0x238] sm:$0xff] %vm1251, %v1122
      %1324 = vst.msk [vmem:[%s190 + $0x240] sm:$0xff] %vm1251, %v1123
      %1325 = vst.msk [vmem:[%s190 + $0x248] sm:$0xff] %vm1251, %v1124
      %1326 = vst.msk [vmem:[%s190 + $0x250] sm:$0xff] %vm1251, %v1125
      %1327 = vst.msk [vmem:[%s190 + $0x258] sm:$0xff] %vm1251, %v1126
      %1328 = vst.msk [vmem:[%s190 + $0x260] sm:$0xff] %vm1251, %v1127
      %1329 = vst.msk [vmem:[%s190 + $0x268] sm:$0xff] %vm1251, %v1128
      %1330 = vst.msk [vmem:[%s190 + $0x270] sm:$0xff] %vm1251, %v1129
      %1331 = vst.msk [vmem:[%s190 + $0x278] sm:$0xff] %vm1251, %v1130
      %1332 = vst.msk [vmem:[%s190 + $0x280] sm:$0xff] %vm1251, %v1131
      %1333 = vst.msk [vmem:[%s190 + $0x288] sm:$0xff] %vm1251, %v1132
      %1334 = vst.msk [vmem:[%s190 + $0x290] sm:$0xff] %vm1251, %v1133
      %1335 = vst.msk [vmem:[%s190 + $0x298] sm:$0xff] %vm1251, %v1134
      %1336 = vst.msk [vmem:[%s190 + $0x2a0] sm:$0xff] %vm1251, %v1135
      %1337 = vst.msk [vmem:[%s190 + $0x2a8] sm:$0xff] %vm1251, %v1136
      %1338 = vst.msk [vmem:[%s190 + $0x2b0] sm:$0xff] %vm1251, %v1137
      %1339 = vst.msk [vmem:[%s190 + $0x2b8] sm:$0xff] %vm1251, %v1138
      %1340 = vst.msk [vmem:[%s190 + $0x2c0] sm:$0xff] %vm1251, %v1139
      %1341 = vst.msk [vmem:[%s190 + $0x2c8] sm:$0xff] %vm1251, %v1140
      %1342 = vst.msk [vmem:[%s190 + $0x2d0] sm:$0xff] %vm1251, %v1141
      %1343 = vst.msk [vmem:[%s190 + $0x2d8] sm:$0xff] %vm1251, %v1142
      %1344 = vst.msk [vmem:[%s190 + $0x2e0] sm:$0xff] %vm1251, %v1143
      %1345 = vst.msk [vmem:[%s190 + $0x2e8] sm:$0xff] %vm1251, %v1144
      %1346 = vst.msk [vmem:[%s190 + $0x2f0] sm:$0xff] %vm1251, %v1145
      %1347 = vst.msk [vmem:[%s190 + $0x2f8] sm:$0xff] %vm1251, %v1146
      %1348 = vst.msk [vmem:[%s190 + $0x300] sm:$0xff] %vm1251, %v1147
      %1349 = vst.msk [vmem:[%s190 + $0x308] sm:$0xff] %vm1251, %v1148
      %1350 = vst.msk [vmem:[%s190 + $0x310] sm:$0xff] %vm1251, %v1149
      %1351 = vst.msk [vmem:[%s190 + $0x318] sm:$0xff] %vm1251, %v1150
      %1352 = vst.msk [vmem:[%s190 + $0x320] sm:$0xff] %vm1251, %v1151
      %1353 = vst.msk [vmem:[%s190 + $0x328] sm:$0xff] %vm1251, %v1152
      %1354 = vst.msk [vmem:[%s190 + $0x330] sm:$0xff] %vm1251, %v1153
      %1355 = vst.msk [vmem:[%s190 + $0x338] sm:$0xff] %vm1251, %v1154
      %1356 = vst.msk [vmem:[%s190 + $0x340] sm:$0xff] %vm1251, %v1155
      %1357 = vst.msk [vmem:[%s190 + $0x348] sm:$0xff] %vm1251, %v1156
      %1358 = vst.msk [vmem:[%s190 + $0x350] sm:$0xff] %vm1251, %v1157
      %1359 = vst.msk [vmem:[%s190 + $0x358] sm:$0xff] %vm1251, %v1158
      %1360 = vst.msk [vmem:[%s190 + $0x360] sm:$0xff] %vm1251, %v1159
      %1361 = vst.msk [vmem:[%s190 + $0x368] sm:$0xff] %vm1251, %v1160
      %1362 = vst.msk [vmem:[%s190 + $0x370] sm:$0xff] %vm1251, %v1161
      %1363 = vst.msk [vmem:[%s190 + $0x378] sm:$0xff] %vm1251, %v1162
      %1364 = vst.msk [vmem:[%s190 + $0x380] sm:$0xff] %vm1251, %v1163
      %1365 = vst.msk [vmem:[%s190 + $0x388] sm:$0xff] %vm1251, %v1164
      %1366 = vst.msk [vmem:[%s190 + $0x390] sm:$0xff] %vm1251, %v1165
      %1367 = vst.msk [vmem:[%s190 + $0x398] sm:$0xff] %vm1251, %v1166
      %1368 = vst.msk [vmem:[%s190 + $0x3a0] sm:$0xff] %vm1251, %v1167
      %1369 = vst.msk [vmem:[%s190 + $0x3a8] sm:$0xff] %vm1251, %v1168
      %1370 = vst.msk [vmem:[%s190 + $0x3b0] sm:$0xff] %vm1251, %v1169
      %1371 = vst.msk [vmem:[%s190 + $0x3b8] sm:$0xff] %vm1251, %v1170
      %1372 = vst.msk [vmem:[%s190 + $0x3c0] sm:$0xff] %vm1251, %v1171
      %1373 = vst.msk [vmem:[%s190 + $0x3c8] sm:$0xff] %vm1251, %v1172
      %1374 = vst.msk [vmem:[%s190 + $0x3d0] sm:$0xff] %vm1251, %v1173
      %1375 = vst.msk [vmem:[%s190 + $0x3d8] sm:$0xff] %vm1251, %v1174
      %1376 = vst.msk [vmem:[%s190 + $0x3e0] sm:$0xff] %vm1251, %v1175
      %1377 = vst.msk [vmem:[%s190 + $0x3e8] sm:$0xff] %vm1251, %v1176
      %1378 = vst.msk [vmem:[%s190 + $0x3f0] sm:$0xff] %vm1251, %v1177
      %1379 = vst.msk [vmem:[%s190 + $0x3f8] sm:$0xff] %vm1251, %v1178
      %1380 = vst.msk [vmem:[%s190 + $0x400] sm:$0xff] %vm1251, %v1179
      %1381 = vst.msk [vmem:[%s190 + $0x408] sm:$0xff] %vm1251, %v1180
      %1382 = vst.msk [vmem:[%s190 + $0x410] sm:$0xff] %vm1251, %v1181
      %1383 = vst.msk [vmem:[%s190 + $0x418] sm:$0xff] %vm1251, %v1182
      %1384 = vst.msk [vmem:[%s190 + $0x420] sm:$0xff] %vm1251, %v1183
      %1385 = vst.msk [vmem:[%s190 + $0x428] sm:$0xff] %vm1251, %v1184
      %1386 = vst.msk [vmem:[%s190 + $0x430] sm:$0xff] %vm1251, %v1185
      %1387 = vst.msk [vmem:[%s190 + $0x438] sm:$0xff] %vm1251, %v1186
      %1388 = vst.msk [vmem:[%s190 + $0x440] sm:$0xff] %vm1251, %v1187
      %1389 = vst.msk [vmem:[%s190 + $0x448] sm:$0xff] %vm1251, %v1188
      %1390 = vst.msk [vmem:[%s190 + $0x450] sm:$0xff] %vm1251, %v1189
      %1391 = vst.msk [vmem:[%s190 + $0x458] sm:$0xff] %vm1251, %v1190
      %1392 = vst.msk [vmem:[%s190 + $0x460] sm:$0xff] %vm1251, %v1191
      %1393 = vst.msk [vmem:[%s190 + $0x468] sm:$0xff] %vm1251, %v1192
      %1394 = vst.msk [vmem:[%s190 + $0x470] sm:$0xff] %vm1251, %v1193
      %1395 = vst.msk [vmem:[%s190 + $0x478] sm:$0xff] %vm1251, %v1194
      %1396 = vst.msk [vmem:[%s190 + $0x480] sm:$0xff] %vm1251, %v1195
      %1397 = vst.msk [vmem:[%s190 + $0x488] sm:$0xff] %vm1251, %v1196
      %1398 = vst.msk [vmem:[%s190 + $0x490] sm:$0xff] %vm1251, %v1197
      %1399 = vst.msk [vmem:[%s190 + $0x498] sm:$0xff] %vm1251, %v1198
      %1400 = vst.msk [vmem:[%s190 + $0x4a0] sm:$0xff] %vm1251, %v1199
      %1401 = vst.msk [vmem:[%s190 + $0x4a8] sm:$0xff] %vm1251, %v1200
      %1402 = vst.msk [vmem:[%s190 + $0x4b0] sm:$0xff] %vm1251, %v1201
      %1403 = vst.msk [vmem:[%s190 + $0x4b8] sm:$0xff] %vm1251, %v1202
      %1404 = vst.msk [vmem:[%s190 + $0x4c0] sm:$0xff] %vm1251, %v1203
      %1405 = vst.msk [vmem:[%s190 + $0x4c8] sm:$0xff] %vm1251, %v1204
      %1406 = vst.msk [vmem:[%s190 + $0x4d0] sm:$0xff] %vm1251, %v1205
      %1407 = vst.msk [vmem:[%s190 + $0x4d8] sm:$0xff] %vm1251, %v1206
      %1408 = vst.msk [vmem:[%s190 + $0x4e0] sm:$0xff] %vm1251, %v1207
      %1409 = vst.msk [vmem:[%s190 + $0x4e8] sm:$0xff] %vm1251, %v1208
      %1410 = vst.msk [vmem:[%s190 + $0x4f0] sm:$0xff] %vm1251, %v1209
      %1411 = vst.msk [vmem:[%s190 + $0x4f8] sm:$0xff] %vm1251, %v1210
      %1412 = vst.msk [vmem:[%s190 + $0x500] sm:$0xff] %vm1251, %v1211
      %1413 = vst.msk [vmem:[%s190 + $0x508] sm:$0xff] %vm1251, %v1212
      %1414 = vst.msk [vmem:[%s190 + $0x510] sm:$0xff] %vm1251, %v1213
      %1415 = vst.msk [vmem:[%s190 + $0x518] sm:$0xff] %vm1251, %v1214
      %1416 = vst.msk [vmem:[%s190 + $0x520] sm:$0xff] %vm1251, %v1215
      %1417 = vst.msk [vmem:[%s190 + $0x528] sm:$0xff] %vm1251, %v1216
      %1418 = vst.msk [vmem:[%s190 + $0x530] sm:$0xff] %vm1251, %v1217
      %1419 = vst.msk [vmem:[%s190 + $0x538] sm:$0xff] %vm1251, %v1218
      %1420 = vst.msk [vmem:[%s190 + $0x540] sm:$0xff] %vm1251, %v1219
      %1421 = vst.msk [vmem:[%s190 + $0x548] sm:$0xff] %vm1251, %v1220
      %1422 = vst.msk [vmem:[%s190 + $0x550] sm:$0xff] %vm1251, %v1221
      %1423 = vst.msk [vmem:[%s190 + $0x558] sm:$0xff] %vm1251, %v1222
      %1424 = vst.msk [vmem:[%s190 + $0x560] sm:$0xff] %vm1251, %v1223
      %1425 = vst.msk [vmem:[%s190 + $0x568] sm:$0xff] %vm1251, %v1224
      %1426 = vst.msk [vmem:[%s190 + $0x570] sm:$0xff] %vm1251, %v1225
      %1427 = vst.msk [vmem:[%s190 + $0x578] sm:$0xff] %vm1251, %v1226
      %1428 = vst.msk [vmem:[%s190 + $0x580] sm:$0xff] %vm1251, %v1227
      %1429 = vst.msk [vmem:[%s190 + $0x588] sm:$0xff] %vm1251, %v1228
      %1430 = vst.msk [vmem:[%s190 + $0x590] sm:$0xff] %vm1251, %v1229
      %1431 = vst.msk [vmem:[%s190 + $0x598] sm:$0xff] %vm1251, %v1230
      %1432 = vst.msk [vmem:[%s190 + $0x5a0] sm:$0xff] %vm1251, %v1231
      %1433 = vst.msk [vmem:[%s190 + $0x5a8] sm:$0xff] %vm1251, %v1232
      %1434 = vst.msk [vmem:[%s190 + $0x5b0] sm:$0xff] %vm1251, %v1233
      %1435 = vst.msk [vmem:[%s190 + $0x5b8] sm:$0xff] %vm1251, %v1234
      %1436 = vst.msk [vmem:[%s190 + $0x5c0] sm:$0xff] %vm1251, %v1235
      %1437 = vst.msk [vmem:[%s190 + $0x5c8] sm:$0xff] %vm1251, %v1236
      %1438 = vst.msk [vmem:[%s190 + $0x5d0] sm:$0xff] %vm1251, %v1237
      %1439 = vst.msk [vmem:[%s190 + $0x5d8] sm:$0xff] %vm1251, %v1238
      %1440 = vst.msk [vmem:[%s190 + $0x5e0] sm:$0xff] %vm1251, %v1239
      %1441 = vst.msk [vmem:[%s190 + $0x5e8] sm:$0xff] %vm1251, %v1240
      %1442 = vst.msk [vmem:[%s190 + $0x5f0] sm:$0xff] %vm1251, %v1241
      %1443 = vst.msk [vmem:[%s190 + $0x5f8] sm:$0xff] %vm1251, %v1242
      %1444 = vst.msk [vmem:[%s190 + $0x600] sm:$0xff] %vm1251, %v1243
      %1445 = vst.msk [vmem:[%s190 + $0x608] sm:$0xff] %vm1251, %v1244
      %1446 = vst.msk [vmem:[%s190 + $0x610] sm:$0xff] %vm1251, %v1245
      %1447 = vst.msk [vmem:[%s190 + $0x618] sm:$0xff] %vm1251, %v1246
      %1448 = vst.msk [vmem:[%s190 + $0x620] sm:$0xff] %vm1251, %v1247
      %1449 = vst.msk [vmem:[%s190 + $0x628] sm:$0xff] %vm1251, %v1248
      %1450 = vst.msk [vmem:[%s190 + $0x630] sm:$0xff] %vm1251, %v1249
      %1451 = vst.msk [vmem:[%s190 + $0x638] sm:$0xff] %vm1251, %v1250
      %p1452 = scmp.lt.s32.totalorder %s14, 1
      %s1453 = scalar_select %p1452, %s14, 1
      %s1454 = smul.addr %s1453, 200
      %s1455 = smul.addr %s1454, 8
      %s1456 = scalar_lea.vmem %s3, %s1455
      // Predicated region
      $region33: #{input_embedder_forward.3} parent=31 // pred_check
        %p1457 = pneg %p105
      $region34: #{input_embedder_forward.3} parent=31 // pred_check_branch
        %1459 = sbr.rel (%p1457) target = $region36
      $region35: #{input_embedder_forward.3} parent=31 // pred_region
        _
      $region36: #{input_embedder_forward.3} parent=31 // pred_fallthru
        _
    $region32: #{input_embedder_forward.3} parent=5 // pred_fallthru
      _
    %p1460 = scmp.le.s32.totalorder 2, %s9
    // Predicated region
    $region37: #{input_embedder_forward.3} parent=5 // pred_check
      %p1461 = pneg %p1460
    $region38: #{input_embedder_forward.3} parent=5 // pred_check_branch
      %1463 = sbr.rel (%p1461) target = $region40
    $region39: #{input_embedder_forward.3} parent=5 // pred_region
      %s1464 = ssub.s32 %s9, 2
      // Predicated region
      $region41: #{input_embedder_forward.3} parent=39 // pred_check
        %p1465 = pneg %p111
      $region42: #{input_embedder_forward.3} parent=39 // pred_check_branch
        %1467 = sbr.rel (%p1465) target = $region44
      $region43: #{input_embedder_forward.3} parent=39 // pred_region
        %p1468 = scmp.lt.s32.totalorder %s15, 1
        %s1469 = scalar_select %p1468, %s15, 1
        %s1470 = smul.addr %s1469, 200
        %s1471 = smul.addr %s1470, 8
        %s1472 = scalar_lea.vmem %s3, %s1471
      $region44: #{input_embedder_forward.3} parent=39 // pred_fallthru
        _
    $region40: #{input_embedder_forward.3} parent=5 // pred_fallthru
      _
  $region6: #{input_embedder_forward.3} parent=0 // loop_footer
    %s13 = sadd.s32 1, %s9
  $region7: #{input_embedder_forward.3} parent=0 // loop_footer_branch
    %8 = sbr.rel target = $region3
  $region8: #{input_embedder_forward.3} parent=0 // loop_exit
    _

</llo_original>
